<compile_context>
chip_gen: v6e
topology: v6e:2x2x1
jax: 0.10.0
libtpu: 0.0.40
codegen_flags: <defaults>
</compile_context>

<pallas_src>
import functools

import jax
import jax.numpy as jnp
from jax import lax
from jax.experimental import pallas as pl
from jax.experimental.pallas import tpu as pltpu


def _cross_attn_kernel(*refs, heads, dim_head, kv_len, has_mask,
                       compute_dtype, approx_recip):
    """One (batch, query-tile) grid cell of the fused CrossAttention forward.

    Layout: channels on sublanes, sequence on lanes (the module's native NC1S
    layout with the singleton spatial dim squeezed).
    """
    if has_mask:
        (x_ref, ctx_ref, mask_ref, wq_ref, wk_ref, wv_ref, wo_ref, bo_ref,
         o_ref, k_ref, v_ref, attn_ref) = refs
    else:
        (x_ref, ctx_ref, wq_ref, wk_ref, wv_ref, wo_ref, wo_bias_dummy,
         o_ref, k_ref, v_ref, attn_ref) = (refs[0], refs[1], refs[2], refs[3],
                                           refs[4], refs[5], refs[6], refs[7],
                                           refs[8], refs[9], refs[10])
        bo_ref = wo_bias_dummy
        mask_ref = None

    # ---- K/V projections: only once per batch element (query axis is the
    # inner "arbitrary" grid axis), cached in VMEM scratch across q tiles. ----
    @pl.when(pl.program_id(1) == 0)
    def _():
        ctx = ctx_ref[0]                                   # (Dc, Skp)
        k_ref[...] = jnp.dot(wk_ref[...], ctx)             # (HD, Skp)
        v_ref[...] = jnp.dot(wv_ref[...], ctx)             # (HD, Skp)

    # ---- Q projection for this query tile (scale folded into Wq). ----
    x = x_ref[0]                                           # (Dq, tq)
    q = jnp.dot(wq_ref[...], x)                            # (HD, tq) compute dtype

    skp = k_ref.shape[-1]
    # Additive key bias: user mask (if any) + padding mask from an iota.
    bias = None
    if has_mask:
        bias = mask_ref[0]                                 # (1, Skp) f32
    if kv_len < skp:
        col = lax.broadcasted_iota(jnp.int32, (1, skp), 1)
        pad = jnp.where(col < kv_len, 0.0, -1e9).astype(jnp.float32)
        bias = pad if bias is None else bias + pad

    dh = dim_head
    for h in range(heads):                 # static unroll; heads is small
        qh = q[h * dh:(h + 1) * dh, :]     # (dh, tq)
        kh = k_ref[h * dh:(h + 1) * dh, :]  # (dh, Skp)
        vh = v_ref[h * dh:(h + 1) * dh, :]  # (dh, Skp)

        # Scores: contract dim_head on both operands (LHS-transposed MXU
        # matmul) -> (tq, Skp); no explicit q transpose / XLU pass.
        s = lax.dot_general(qh, kh, (((0,), (0,)), ((), ())),
                            preferred_element_type=jnp.float32)
        if bias is not None:
            s = s + bias

        m = jnp.max(s, axis=-1, keepdims=True)             # (tq, 1)
        p = jnp.exp(s - m)                                  # un-normalized
        l = jnp.sum(p, axis=-1, keepdims=True)              # (tq, 1)

        # PV with un-normalized p: (dh, Skp) x (tq, Skp) -> (dh, tq) f32.
        ah = lax.dot_general(vh, p.astype(compute_dtype),
                             (((1,), (1,)), ((), ())),
                             preferred_element_type=jnp.float32)

        # Deferred softmax normalization on the small (dh, tq) result.
        if approx_recip:
            inv = pl.reciprocal(l, approx=True)              # EUP slot on TPU
        else:
            inv = 1.0 / l
        attn_ref[h * dh:(h + 1) * dh, :] = (ah * inv.T).astype(compute_dtype)

    # Fused output 1x1 conv over ALL heads: one (Dq, HD) x (HD, tq) matmul.
    out = jnp.dot(wo_ref[...], attn_ref[...],
                  preferred_element_type=jnp.float32)        # (Dq, tq)
    out = out + bo_ref[...]                                  # (Dq, 1) broadcast
    o_ref[0] = out.astype(o_ref.dtype)       # single write, no accumulation


def _vmem_capacity_bytes():
    """Physical VMEM of the attached TPU (128 MiB fallback off-TPU)."""
    if jax.default_backend() != "tpu":
        return 128 << 20
    try:
        return int(pltpu.get_tpu_info().vmem_capacity_bytes)
    except Exception:
        return 128 << 20


def _pick_q_tile(sq, skp, vmem_cap):
    """Lane-dense query tile, generation/VMEM aware."""
    if vmem_cap <= (64 << 20) and skp >= 2048:
        max_t = 256          # v7x-class: keep f32 score slabs out of spill regime
    elif skp <= 512:
        max_t = 1024         # short-key cross-attn: amortize per-step overhead
    else:
        max_t = 512
    for t in (1024, 512, 256, 128):
        if t <= max_t and sq % t == 0:
            return t
    return sq                # small / odd shapes: one full-extent tile


def _block_spec(shape, index_map, pipeline_mode=None):
    """BlockSpec with optional pipeline_mode (graceful on older jax)."""
    if pipeline_mode is None:
        return pl.BlockSpec(shape, index_map)
    try:
        return pl.BlockSpec(shape, index_map, pipeline_mode=pipeline_mode)
    except TypeError:
        return pl.BlockSpec(shape, index_map)


def cross_attention_pallas(hidden_states, params, context=None, mask=None,
                           heads=8, dim_head=64, out_dtype=None):
    """Matches CrossAttention.forward (SPLIT_EINSUM semantics). NC1S in/out."""
    B, Dq, one, Sq = hidden_states.shape
    assert one == 1, "expected NC1S input (H dim must be 1)"
    if context is None:
        context = hidden_states
    _, Dc, _, Sk = context.shape

    HD = heads * dim_head
    scale = float(dim_head) ** (-0.5)
    # Default f32 output to match the module; pass jnp.bfloat16 on bandwidth-
    # bound chips (v5e) if the consumer tolerates it.
    out_dtype = jnp.float32 if out_dtype is None else out_dtype

    # Backend-aware matmul dtype: bf16 on real TPUs, f32 elsewhere (CPU /
    # interpret execution does not support bf16 x bf16 dots).
    on_tpu = jax.default_backend() == "tpu"
    cdt = jnp.bfloat16 if on_tpu else jnp.float32

    # NC1S -> (B, C, S): pure reshape (no HBM transpose).
    x3 = hidden_states.reshape(B, Dq, Sq).astype(cdt)
    c3 = context.reshape(B, Dc, Sk).astype(cdt)

    # Pad the key axis to a lane-dense multiple of 128; pad columns get a
    # -1e9 additive bias inside the kernel.
    Skp = 128 * pl.cdiv(Sk, 128)
    if Skp != Sk:
        c3 = jnp.pad(c3, ((0, 0), (0, 0), (0, Skp - Sk)))

    # 1x1-conv weights are channel-contraction shaped (out, in); fold the
    # attention scale into Wq so there is no in-kernel scores multiply.
    wq = (params["wq"].reshape(HD, Dq) * scale).astype(cdt)
    wk = params["wk"].reshape(HD, Dc).astype(cdt)
    wv = params["wv"].reshape(HD, Dc).astype(cdt)
    wo = params["wo"].reshape(Dq, HD).astype(cdt)
    bo = params["bo"].reshape(Dq, 1).astype(jnp.float32)

    has_mask = mask is not None
    inputs = [x3, c3]
    if has_mask:
        # Mirror the PyTorch dtype handling: additive -1e4 key bias.
        if mask.dtype == jnp.bool_:
            mask = (~mask).astype(jnp.float32) * -10000.0
        elif jnp.issubdtype(mask.dtype, jnp.integer):
            mask = (1 - mask).astype(jnp.float32) * -10000.0
        mvec = mask.reshape(B, 1, Sk).astype(jnp.float32)
        if Skp != Sk:
            mvec = jnp.pad(mvec, ((0, 0), (0, 0), (0, Skp - Sk)))
        inputs.append(mvec)
    inputs += [wq, wk, wv, wo, bo]

    vmem_cap = _vmem_capacity_bytes()
    tq = _pick_q_tile(Sq, Skp, vmem_cap)
    grid = (B, Sq // tq)

    # Grid-invariant weights: single-buffer them (no wasted 2x VMEM copy).
    w_pm = pl.Buffered(1)
    # ctx changes only with the batch index; single-buffer it when large.
    ctx_pm = pl.Buffered(1) if Dc * Skp * jnp.dtype(cdt).itemsize > (4 << 20) else None

    in_specs = [
        _block_spec((1, Dq, tq), lambda b, i: (b, 0, i)),              # x tile
        _block_spec((1, Dc, Skp), lambda b, i: (b, 0, 0), ctx_pm),     # ctx
    ]
    if has_mask:
        in_specs.append(_block_spec((1, 1, Skp), lambda b, i: (b, 0, 0)))
    in_specs += [
        _block_spec((HD, Dq), lambda b, i: (0, 0), w_pm),              # Wq
        _block_spec((HD, Dc), lambda b, i: (0, 0), w_pm),              # Wk
        _block_spec((HD, Dc), lambda b, i: (0, 0), w_pm),              # Wv
        _block_spec((Dq, HD), lambda b, i: (0, 0), w_pm),              # Wo
        _block_spec((Dq, 1), lambda b, i: (0, 0), w_pm),               # out bias
    ]

    scratch_shapes = [
        pltpu.VMEM((HD, Skp), cdt),   # cached K (per batch element)
        pltpu.VMEM((HD, Skp), cdt),   # cached V
        pltpu.VMEM((HD, tq), cdt),    # per-head attention output (pre out-proj)
    ]

    kernel = functools.partial(_cross_attn_kernel, heads=heads,
                               dim_head=dim_head, kv_len=Sk,
                               has_mask=has_mask, compute_dtype=cdt,
                               approx_recip=on_tpu)

    # Generation-aware VMEM limit: ~48 MiB on 64 MiB chips (v7x), ~100 MiB on
    # 128 MiB chips (v5e/v6e).
    vmem_limit = int(min(vmem_cap * 0.8, vmem_cap - (16 << 20)))

    out = pl.pallas_call(
        kernel,
        out_shape=jax.ShapeDtypeStruct((B, Dq, Sq), out_dtype),
        grid_spec=pltpu.PrefetchScalarGridSpec(
            num_scalar_prefetch=0,
            grid=grid,
            in_specs=in_specs,
            out_specs=pl.BlockSpec((1, Dq, tq), lambda b, i: (b, 0, i)),
            scratch_shapes=scratch_shapes,
        ),
        compiler_params=pltpu.CompilerParams(
            # Batch can shard across TensorCores; the query-tile axis carries
            # the K/V scratch dependency, so it is "arbitrary".
            dimension_semantics=("parallel", "arbitrary"),
            vmem_limit_bytes=vmem_limit,
        ),
    )(*inputs)

    # (B, Dq, Sq) -> NC1S: pure reshape, no transpose.
    return out.reshape(B, Dq, 1, Sq)


def reference_cross_attention(hidden, params, context, mask, heads, dim_head):
    """Pure-JAX f32 reference replicating the PyTorch/Apple split_einsum math."""
    if context is None:
        context = hidden
    xq = hidden[:, :, 0, :]   # (B, Dq, Sq)
    xc = context[:, :, 0, :]  # (B, Dc, Sk)
    q = jnp.einsum('oc,bcs->bos', params['wq'], xq)
    k = jnp.einsum('oc,bcs->bos', params['wk'], xc)
    v = jnp.einsum('oc,bcs->bos', params['wv'], xc)
    B, Sq, Sk = xq.shape[0], xq.shape[-1], xc.shape[-1]
    H, dh = heads, dim_head
    qh = q.reshape(B, H, dh, Sq)
    kh = k.reshape(B, H, dh, Sk)
    vh = v.reshape(B, H, dh, Sk)
    scores = jnp.einsum('bhcq,bhck->bhqk', qh, kh) * dh ** (-0.5)
    if mask is not None:
        scores = scores + mask.reshape(B, 1, 1, Sk)
    w = jax.nn.softmax(scores, axis=-1)
    attn = jnp.einsum('bhqk,bhck->bhcq', w, vh).reshape(B, H * dh, Sq)
    out = jnp.einsum('oc,bcs->bos', params['wo'], attn) + params['bo'][None, :, None]
    return out[:, :, None, :]


if __name__ == "__main__":
    key = jax.random.PRNGKey(0)
    B, query_dim, context_dim = 2, 32, 48
    heads, dim_head = 4, 8
    Sq, Sk = 16, 8
    inner_dim = heads * dim_head

    ks = jax.random.split(key, 8)
    hidden = jax.random.normal(ks[0], (B, query_dim, 1, Sq), jnp.float32)
    context = jax.random.normal(ks[1], (B, context_dim, 1, Sk), jnp.float32)

    # deterministic synthetic parameters (shapes from the module __init__)
    params = {
        "wq": jax.random.normal(ks[2], (inner_dim, query_dim), jnp.float32) * 0.1,   # to_q (1x1 conv, no bias)
        "wk": jax.random.normal(ks[3], (inner_dim, context_dim), jnp.float32) * 0.1,  # to_k
        "wv": jax.random.normal(ks[4], (inner_dim, context_dim), jnp.float32) * 0.1,  # to_v
        "wo": jax.random.normal(ks[5], (query_dim, inner_dim), jnp.float32) * 0.1,    # to_out conv weight
        "bo": jax.random.normal(ks[6], (query_dim,), jnp.float32) * 0.1,              # to_out conv bias
    }

    # --- no-mask cross-attention path (the common SD case) ---
    out = cross_attention_pallas(hidden, params, context=context, mask=None,
                                 heads=heads, dim_head=dim_head)
    out = jax.block_until_ready(out)
    ref = reference_cross_attention(hidden, params, context, None, heads, dim_head)
    assert out.shape == (B, query_dim, 1, Sq)
    assert jnp.allclose(out, ref, atol=2e-2, rtol=2e-2), \
        float(jnp.max(jnp.abs(out - ref)))

    # --- masked path (boolean per-key mask, exercises the mask specialization) ---
    bmask = jax.random.bernoulli(ks[7], 0.8, (B, Sk)).at[:, 0].set(True)
    out_m = cross_attention_pallas(hidden, params, context=context, mask=bmask,
                                   heads=heads, dim_head=dim_head)
    out_m = jax.block_until_ready(out_m)
    mref = (~bmask).astype(jnp.float32) * -10000.0
    ref_m = reference_cross_attention(hidden, params, context, mref, heads, dim_head)
    assert jnp.allclose(out_m, ref_m, atol=2e-2, rtol=2e-2), \
        float(jnp.max(jnp.abs(out_m - ref_m)))

    print("KERNEL_OK")
</pallas_src>

<mosaic_0001>
module attributes {stable_mosaic.version = 11 : i64} {
  func.func @_cross_attn_kernel(%arg0: i32, %arg1: i32, %arg2: memref<1x32x16xf32, #tpu.memory_space<vmem>>, %arg3: memref<1x48x128xf32, #tpu.memory_space<vmem>>, %arg4: memref<32x32xf32, #tpu.memory_space<vmem>>, %arg5: memref<32x48xf32, #tpu.memory_space<vmem>>, %arg6: memref<32x48xf32, #tpu.memory_space<vmem>>, %arg7: memref<32x32xf32, #tpu.memory_space<vmem>>, %arg8: memref<32x1xf32, #tpu.memory_space<vmem>>, %arg9: memref<1x32x16xf32, #tpu.memory_space<vmem>>, %arg10: memref<32x128xf32, #tpu.memory_space<vmem>>, %arg11: memref<32x128xf32, #tpu.memory_space<vmem>>, %arg12: memref<32x16xf32, #tpu.memory_space<vmem>>) attributes {dimension_semantics = [#tpu.dimension_semantics<parallel>, #tpu.dimension_semantics<arbitrary>], iteration_bounds = array<i64: 2, 1>, scalar_prefetch = 0 : i64, scratch_operands = 3 : i64, tpu.core_type = #tpu.core_type<tc>, window_params = [{transform_indices = @transform_0, window_bounds = array<i64: 1, 32, 16>}, {transform_indices = @transform_1, window_bounds = array<i64: 1, 48, 128>}, {pipeline_mode = #tpu.pipeline_mode<synchronous>, transform_indices = @transform_2, window_bounds = array<i64: 32, 32>}, {pipeline_mode = #tpu.pipeline_mode<synchronous>, transform_indices = @transform_3, window_bounds = array<i64: 32, 48>}, {pipeline_mode = #tpu.pipeline_mode<synchronous>, transform_indices = @transform_4, window_bounds = array<i64: 32, 48>}, {pipeline_mode = #tpu.pipeline_mode<synchronous>, transform_indices = @transform_5, window_bounds = array<i64: 32, 32>}, {pipeline_mode = #tpu.pipeline_mode<synchronous>, transform_indices = @transform_6, window_bounds = array<i64: 32, 1>}, {transform_indices = @transform_7, window_bounds = array<i64: 1, 32, 16>}]} {
    %c0_i32 = arith.constant 0 : i32
    %0 = arith.cmpi eq, %arg1, %c0_i32 : i32
    %1 = arith.extui %0 : i1 to i32
    %c0_i32_0 = arith.constant 0 : i32
    %2 = arith.cmpi ne, %1, %c0_i32_0 : i32
    scf.if %2 {
      %c0_58 = arith.constant 0 : index
      %c0_59 = arith.constant 0 : index
      %c0_60 = arith.constant 0 : index
      %102 = vector.load %arg3[%c0_58, %c0_59, %c0_60] : memref<1x48x128xf32, #tpu.memory_space<vmem>>, vector<1x48x128xf32>
      %103 = vector.shape_cast %102 : vector<1x48x128xf32> to vector<48x128xf32>
      %c0_61 = arith.constant 0 : index
      %c0_62 = arith.constant 0 : index
      %104 = vector.load %arg5[%c0_61, %c0_62] : memref<32x48xf32, #tpu.memory_space<vmem>>, vector<32x48xf32>
      %cst_63 = arith.constant dense<0.000000e+00> : vector<32x128xf32>
      %105 = tpu.matmul %104, %103, %cst_63 {dimension_numbers = #tpu.dot_dimension_numbers<[1], [0], [0], [1], [0, 0, 1, 1], [], []>} : vector<32x48xf32>, vector<48x128xf32>, vector<32x128xf32> -> vector<32x128xf32>
      %c0_64 = arith.constant 0 : index
      %c0_65 = arith.constant 0 : index
      %106 = vector.load %arg10[%c0_64, %c0_65] : memref<32x128xf32, #tpu.memory_space<vmem>>, vector<32x128xf32>
      tpu.vector_store %arg10[%c0_64, %c0_65], %105 {strides = array<i32>} : memref<32x128xf32, #tpu.memory_space<vmem>>, vector<32x128xf32>,
      %c0_66 = arith.constant 0 : index
      %c0_67 = arith.constant 0 : index
      %107 = vector.load %arg6[%c0_66, %c0_67] : memref<32x48xf32, #tpu.memory_space<vmem>>, vector<32x48xf32>
      %cst_68 = arith.constant dense<0.000000e+00> : vector<32x128xf32>
      %108 = tpu.matmul %107, %103, %cst_68 {dimension_numbers = #tpu.dot_dimension_numbers<[1], [0], [0], [1], [0, 0, 1, 1], [], []>} : vector<32x48xf32>, vector<48x128xf32>, vector<32x128xf32> -> vector<32x128xf32>
      %c0_69 = arith.constant 0 : index
      %c0_70 = arith.constant 0 : index
      %109 = vector.load %arg11[%c0_69, %c0_70] : memref<32x128xf32, #tpu.memory_space<vmem>>, vector<32x128xf32>
      tpu.vector_store %arg11[%c0_69, %c0_70], %108 {strides = array<i32>} : memref<32x128xf32, #tpu.memory_space<vmem>>, vector<32x128xf32>,
    } else {
    }
    %c0 = arith.constant 0 : index
    %c0_1 = arith.constant 0 : index
    %c0_2 = arith.constant 0 : index
    %3 = vector.load %arg2[%c0, %c0_1, %c0_2] : memref<1x32x16xf32, #tpu.memory_space<vmem>>, vector<1x32x16xf32>
    %4 = vector.shape_cast %3 : vector<1x32x16xf32> to vector<32x16xf32>
    %c0_3 = arith.constant 0 : index
    %c0_4 = arith.constant 0 : index
    %5 = vector.load %arg4[%c0_3, %c0_4] : memref<32x32xf32, #tpu.memory_space<vmem>>, vector<32x32xf32>
    %cst = arith.constant dense<0.000000e+00> : vector<32x16xf32>
    %6 = tpu.matmul %5, %4, %cst {dimension_numbers = #tpu.dot_dimension_numbers<[1], [0], [0], [1], [0, 0, 1, 1], [], []>} : vector<32x32xf32>, vector<32x16xf32>, vector<32x16xf32> -> vector<32x16xf32>
    %7 = tpu.iota {dimensions = array<i32: 1>} : vector<1x128xi32>
    %c8_i32 = arith.constant 8 : i32
    %8 = vector.broadcast %c8_i32 : i32 to vector<1x128xi32>
    %9 = arith.cmpi slt, %7, %8 : vector<1x128xi32>
    %cst_5 = arith.constant 0.000000e+00 : f32
    %cst_6 = arith.constant -1.000000e+09 : f32
    %10 = vector.broadcast %cst_5 : f32 to vector<1x128xf32>
    %11 = vector.broadcast %cst_6 : f32 to vector<1x128xf32>
    %12 = arith.select %9, %10, %11 : vector<1x128xi1>, vector<1x128xf32>
    %13 = vector.extract_strided_slice %6 {offsets = [0, 0], sizes = [8, 16], strides = [1, 1]} : vector<32x16xf32> to vector<8x16xf32>
    %c0_7 = arith.constant 0 : index
    %c0_8 = arith.constant 0 : index
    %14 = vector.load %arg10[%c0_7, %c0_8] : memref<32x128xf32, #tpu.memory_space<vmem>>, vector<8x128xf32>
    %c0_9 = arith.constant 0 : index
    %c0_10 = arith.constant 0 : index
    %15 = vector.load %arg11[%c0_9, %c0_10] : memref<32x128xf32, #tpu.memory_space<vmem>>, vector<8x128xf32>
    %cst_11 = arith.constant dense<0.000000e+00> : vector<16x128xf32>
    %16 = tpu.matmul %13, %14, %cst_11 {dimension_numbers = #tpu.dot_dimension_numbers<[0], [0], [1], [1], [0, 1, 1, 1], [], []>} : vector<8x16xf32>, vector<8x128xf32>, vector<16x128xf32> -> vector<16x128xf32>
    %17 = vector.broadcast %12 : vector<1x128xf32> to vector<16x128xf32>
    %18 = arith.addf %16, %17 : vector<16x128xf32>
    %cst_12 = arith.constant dense<0xFF800000> : vector<16xf32>
    %19 = vector.multi_reduction <maximumf>, %18, %cst_12 [1] : vector<16x128xf32> to vector<16xf32>
    %20 = vector.shape_cast %19 : vector<16xf32> to vector<16x1xf32>
    %21 = vector.broadcast %20 : vector<16x1xf32> to vector<16x128xf32>
    %22 = arith.subf %18, %21 : vector<16x128xf32>
    %23 = math.exp %22 : vector<16x128xf32>
    %cst_13 = arith.constant dense<0.000000e+00> : vector<16xf32>
    %24 = vector.multi_reduction <add>, %23, %cst_13 [1] : vector<16x128xf32> to vector<16xf32>
    %25 = vector.shape_cast %24 : vector<16xf32> to vector<16x1xf32>
    %cst_14 = arith.constant dense<0.000000e+00> : vector<8x16xf32>
    %26 = tpu.matmul %15, %23, %cst_14 {dimension_numbers = #tpu.dot_dimension_numbers<[1], [1], [0], [0], [0, 0, 1, 0], [], []>} : vector<8x128xf32>, vector<16x128xf32>, vector<8x16xf32> -> vector<8x16xf32>
    %cst_15 = arith.constant 1.000000e+00 : f32
    %27 = vector.broadcast %cst_15 : f32 to vector<16x1xf32>
    %28 = arith.divf %27, %25 : vector<16x1xf32>
    %29 = tpu.transpose %28, [1, 0] : vector<16x1xf32> -> vector<1x16xf32>
    %30 = vector.broadcast %29 : vector<1x16xf32> to vector<8x16xf32>
    %31 = arith.mulf %26, %30 : vector<8x16xf32>
    %c0_16 = arith.constant 0 : index
    %c0_17 = arith.constant 0 : index
    %32 = vector.load %arg12[%c0_16, %c0_17] : memref<32x16xf32, #tpu.memory_space<vmem>>, vector<8x16xf32>
    tpu.vector_store %arg12[%c0_16, %c0_17], %31 {strides = array<i32>} : memref<32x16xf32, #tpu.memory_space<vmem>>, vector<8x16xf32>,
    %33 = vector.extract_strided_slice %6 {offsets = [8, 0], sizes = [8, 16], strides = [1, 1]} : vector<32x16xf32> to vector<8x16xf32>
    %c8 = arith.constant 8 : index
    %c0_18 = arith.constant 0 : index
    %34 = vector.load %arg10[%c8, %c0_18] : memref<32x128xf32, #tpu.memory_space<vmem>>, vector<8x128xf32>
    %c8_19 = arith.constant 8 : index
    %c0_20 = arith.constant 0 : index
    %35 = vector.load %arg11[%c8_19, %c0_20] : memref<32x128xf32, #tpu.memory_space<vmem>>, vector<8x128xf32>
    %cst_21 = arith.constant dense<0.000000e+00> : vector<16x128xf32>
    %36 = tpu.matmul %33, %34, %cst_21 {dimension_numbers = #tpu.dot_dimension_numbers<[0], [0], [1], [1], [0, 1, 1, 1], [], []>} : vector<8x16xf32>, vector<8x128xf32>, vector<16x128xf32> -> vector<16x128xf32>
    %37 = vector.broadcast %12 : vector<1x128xf32> to vector<16x128xf32>
    %38 = arith.addf %36, %37 : vector<16x128xf32>
    %cst_22 = arith.constant dense<0xFF800000> : vector<16xf32>
    %39 = vector.multi_reduction <maximumf>, %38, %cst_22 [1] : vector<16x128xf32> to vector<16xf32>
    %40 = vector.shape_cast %39 : vector<16xf32> to vector<16x1xf32>
    %41 = vector.broadcast %40 : vector<16x1xf32> to vector<16x128xf32>
    %42 = arith.subf %38, %41 : vector<16x128xf32>
    %43 = math.exp %42 : vector<16x128xf32>
    %cst_23 = arith.constant dense<0.000000e+00> : vector<16xf32>
    %44 = vector.multi_reduction <add>, %43, %cst_23 [1] : vector<16x128xf32> to vector<16xf32>
    %45 = vector.shape_cast %44 : vector<16xf32> to vector<16x1xf32>
    %cst_24 = arith.constant dense<0.000000e+00> : vector<8x16xf32>
    %46 = tpu.matmul %35, %43, %cst_24 {dimension_numbers = #tpu.dot_dimension_numbers<[1], [1], [0], [0], [0, 0, 1, 0], [], []>} : vector<8x128xf32>, vector<16x128xf32>, vector<8x16xf32> -> vector<8x16xf32>
    %cst_25 = arith.constant 1.000000e+00 : f32
    %47 = vector.broadcast %cst_25 : f32 to vector<16x1xf32>
    %48 = arith.divf %47, %45 : vector<16x1xf32>
    %49 = tpu.transpose %48, [1, 0] : vector<16x1xf32> -> vector<1x16xf32>
    %50 = vector.broadcast %49 : vector<1x16xf32> to vector<8x16xf32>
    %51 = arith.mulf %46, %50 : vector<8x16xf32>
    %c8_26 = arith.constant 8 : index
    %c0_27 = arith.constant 0 : index
    %52 = vector.load %arg12[%c8_26, %c0_27] : memref<32x16xf32, #tpu.memory_space<vmem>>, vector<8x16xf32>
    tpu.vector_store %arg12[%c8_26, %c0_27], %51 {strides = array<i32>} : memref<32x16xf32, #tpu.memory_space<vmem>>, vector<8x16xf32>,
    %53 = vector.extract_strided_slice %6 {offsets = [16, 0], sizes = [8, 16], strides = [1, 1]} : vector<32x16xf32> to vector<8x16xf32>
    %c16 = arith.constant 16 : index
    %c0_28 = arith.constant 0 : index
    %54 = vector.load %arg10[%c16, %c0_28] : memref<32x128xf32, #tpu.memory_space<vmem>>, vector<8x128xf32>
    %c16_29 = arith.constant 16 : index
    %c0_30 = arith.constant 0 : index
    %55 = vector.load %arg11[%c16_29, %c0_30] : memref<32x128xf32, #tpu.memory_space<vmem>>, vector<8x128xf32>
    %cst_31 = arith.constant dense<0.000000e+00> : vector<16x128xf32>
    %56 = tpu.matmul %53, %54, %cst_31 {dimension_numbers = #tpu.dot_dimension_numbers<[0], [0], [1], [1], [0, 1, 1, 1], [], []>} : vector<8x16xf32>, vector<8x128xf32>, vector<16x128xf32> -> vector<16x128xf32>
    %57 = vector.broadcast %12 : vector<1x128xf32> to vector<16x128xf32>
    %58 = arith.addf %56, %57 : vector<16x128xf32>
    %cst_32 = arith.constant dense<0xFF800000> : vector<16xf32>
    %59 = vector.multi_reduction <maximumf>, %58, %cst_32 [1] : vector<16x128xf32> to vector<16xf32>
    %60 = vector.shape_cast %59 : vector<16xf32> to vector<16x1xf32>
    %61 = vector.broadcast %60 : vector<16x1xf32> to vector<16x128xf32>
    %62 = arith.subf %58, %61 : vector<16x128xf32>
    %63 = math.exp %62 : vector<16x128xf32>
    %cst_33 = arith.constant dense<0.000000e+00> : vector<16xf32>
    %64 = vector.multi_reduction <add>, %63, %cst_33 [1] : vector<16x128xf32> to vector<16xf32>
    %65 = vector.shape_cast %64 : vector<16xf32> to vector<16x1xf32>
    %cst_34 = arith.constant dense<0.000000e+00> : vector<8x16xf32>
    %66 = tpu.matmul %55, %63, %cst_34 {dimension_numbers = #tpu.dot_dimension_numbers<[1], [1], [0], [0], [0, 0, 1, 0], [], []>} : vector<8x128xf32>, vector<16x128xf32>, vector<8x16xf32> -> vector<8x16xf32>
    %cst_35 = arith.constant 1.000000e+00 : f32
    %67 = vector.broadcast %cst_35 : f32 to vector<16x1xf32>
    %68 = arith.divf %67, %65 : vector<16x1xf32>
    %69 = tpu.transpose %68, [1, 0] : vector<16x1xf32> -> vector<1x16xf32>
    %70 = vector.broadcast %69 : vector<1x16xf32> to vector<8x16xf32>
    %71 = arith.mulf %66, %70 : vector<8x16xf32>
    %c16_36 = arith.constant 16 : index
    %c0_37 = arith.constant 0 : index
    %72 = vector.load %arg12[%c16_36, %c0_37] : memref<32x16xf32, #tpu.memory_space<vmem>>, vector<8x16xf32>
    tpu.vector_store %arg12[%c16_36, %c0_37], %71 {strides = array<i32>} : memref<32x16xf32, #tpu.memory_space<vmem>>, vector<8x16xf32>,
    %73 = vector.extract_strided_slice %6 {offsets = [24, 0], sizes = [8, 16], strides = [1, 1]} : vector<32x16xf32> to vector<8x16xf32>
    %c24 = arith.constant 24 : index
    %c0_38 = arith.constant 0 : index
    %74 = vector.load %arg10[%c24, %c0_38] : memref<32x128xf32, #tpu.memory_space<vmem>>, vector<8x128xf32>
    %c24_39 = arith.constant 24 : index
    %c0_40 = arith.constant 0 : index
    %75 = vector.load %arg11[%c24_39, %c0_40] : memref<32x128xf32, #tpu.memory_space<vmem>>, vector<8x128xf32>
    %cst_41 = arith.constant dense<0.000000e+00> : vector<16x128xf32>
    %76 = tpu.matmul %73, %74, %cst_41 {dimension_numbers = #tpu.dot_dimension_numbers<[0], [0], [1], [1], [0, 1, 1, 1], [], []>} : vector<8x16xf32>, vector<8x128xf32>, vector<16x128xf32> -> vector<16x128xf32>
    %77 = vector.broadcast %12 : vector<1x128xf32> to vector<16x128xf32>
    %78 = arith.addf %76, %77 : vector<16x128xf32>
    %cst_42 = arith.constant dense<0xFF800000> : vector<16xf32>
    %79 = vector.multi_reduction <maximumf>, %78, %cst_42 [1] : vector<16x128xf32> to vector<16xf32>
    %80 = vector.shape_cast %79 : vector<16xf32> to vector<16x1xf32>
    %81 = vector.broadcast %80 : vector<16x1xf32> to vector<16x128xf32>
    %82 = arith.subf %78, %81 : vector<16x128xf32>
    %83 = math.exp %82 : vector<16x128xf32>
    %cst_43 = arith.constant dense<0.000000e+00> : vector<16xf32>
    %84 = vector.multi_reduction <add>, %83, %cst_43 [1] : vector<16x128xf32> to vector<16xf32>
    %85 = vector.shape_cast %84 : vector<16xf32> to vector<16x1xf32>
    %cst_44 = arith.constant dense<0.000000e+00> : vector<8x16xf32>
    %86 = tpu.matmul %75, %83, %cst_44 {dimension_numbers = #tpu.dot_dimension_numbers<[1], [1], [0], [0], [0, 0, 1, 0], [], []>} : vector<8x128xf32>, vector<16x128xf32>, vector<8x16xf32> -> vector<8x16xf32>
    %cst_45 = arith.constant 1.000000e+00 : f32
    %87 = vector.broadcast %cst_45 : f32 to vector<16x1xf32>
    %88 = arith.divf %87, %85 : vector<16x1xf32>
    %89 = tpu.transpose %88, [1, 0] : vector<16x1xf32> -> vector<1x16xf32>
    %90 = vector.broadcast %89 : vector<1x16xf32> to vector<8x16xf32>
    %91 = arith.mulf %86, %90 : vector<8x16xf32>
    %c24_46 = arith.constant 24 : index
    %c0_47 = arith.constant 0 : index
    %92 = vector.load %arg12[%c24_46, %c0_47] : memref<32x16xf32, #tpu.memory_space<vmem>>, vector<8x16xf32>
    tpu.vector_store %arg12[%c24_46, %c0_47], %91 {strides = array<i32>} : memref<32x16xf32, #tpu.memory_space<vmem>>, vector<8x16xf32>,
    %c0_48 = arith.constant 0 : index
    %c0_49 = arith.constant 0 : index
    %93 = vector.load %arg7[%c0_48, %c0_49] : memref<32x32xf32, #tpu.memory_space<vmem>>, vector<32x32xf32>
    %c0_50 = arith.constant 0 : index
    %c0_51 = arith.constant 0 : index
    %94 = vector.load %arg12[%c0_50, %c0_51] : memref<32x16xf32, #tpu.memory_space<vmem>>, vector<32x16xf32>
    %cst_52 = arith.constant dense<0.000000e+00> : vector<32x16xf32>
    %95 = tpu.matmul %93, %94, %cst_52 {dimension_numbers = #tpu.dot_dimension_numbers<[1], [0], [0], [1], [0, 0, 1, 1], [], []>} : vector<32x32xf32>, vector<32x16xf32>, vector<32x16xf32> -> vector<32x16xf32>
    %c0_53 = arith.constant 0 : index
    %c0_54 = arith.constant 0 : index
    %96 = vector.load %arg8[%c0_53, %c0_54] : memref<32x1xf32, #tpu.memory_space<vmem>>, vector<32x1xf32>
    %97 = vector.broadcast %96 : vector<32x1xf32> to vector<32x16xf32>
    %98 = arith.addf %95, %97 : vector<32x16xf32>
    %c0_55 = arith.constant 0 : index
    %c0_56 = arith.constant 0 : index
    %c0_57 = arith.constant 0 : index
    %99 = vector.load %arg9[%c0_55, %c0_56, %c0_57] : memref<1x32x16xf32, #tpu.memory_space<vmem>>, vector<1x32x16xf32>
    %100 = vector.shape_cast %99 : vector<1x32x16xf32> to vector<32x16xf32>
    %101 = vector.shape_cast %98 : vector<32x16xf32> to vector<1x32x16xf32>
    tpu.vector_store %arg9[%c0_55, %c0_56, %c0_57], %101 {strides = array<i32>} : memref<1x32x16xf32, #tpu.memory_space<vmem>>, vector<1x32x16xf32>,
    return
  }
  func.func @transform_0(%arg0: i32, %arg1: i32) -> (i32, i32, i32) {
    %c0_i32 = arith.constant 0 : i32
    %c0_i32_0 = arith.constant 0 : i32
    return %arg0, %c0_i32, %arg1 : i32, i32, i32
  }
  func.func @transform_1(%arg0: i32, %arg1: i32) -> (i32, i32, i32) {
    %c0_i32 = arith.constant 0 : i32
    %c0_i32_0 = arith.constant 0 : i32
    %c0_i32_1 = arith.constant 0 : i32
    return %arg0, %c0_i32, %c0_i32_0 : i32, i32, i32
  }
  func.func @transform_2(%arg0: i32, %arg1: i32) -> (i32, i32) {
    %c0_i32 = arith.constant 0 : i32
    %c0_i32_0 = arith.constant 0 : i32
    %c0_i32_1 = arith.constant 0 : i32
    return %c0_i32, %c0_i32_0 : i32, i32
  }
  func.func @transform_3(%arg0: i32, %arg1: i32) -> (i32, i32) {
    %c0_i32 = arith.constant 0 : i32
    %c0_i32_0 = arith.constant 0 : i32
    %c0_i32_1 = arith.constant 0 : i32
    return %c0_i32, %c0_i32_0 : i32, i32
  }
  func.func @transform_4(%arg0: i32, %arg1: i32) -> (i32, i32) {
    %c0_i32 = arith.constant 0 : i32
    %c0_i32_0 = arith.constant 0 : i32
    %c0_i32_1 = arith.constant 0 : i32
    return %c0_i32, %c0_i32_0 : i32, i32
  }
  func.func @transform_5(%arg0: i32, %arg1: i32) -> (i32, i32) {
    %c0_i32 = arith.constant 0 : i32
    %c0_i32_0 = arith.constant 0 : i32
    %c0_i32_1 = arith.constant 0 : i32
    return %c0_i32, %c0_i32_0 : i32, i32
  }
  func.func @transform_6(%arg0: i32, %arg1: i32) -> (i32, i32) {
    %c0_i32 = arith.constant 0 : i32
    %c0_i32_0 = arith.constant 0 : i32
    %c0_i32_1 = arith.constant 0 : i32
    return %c0_i32, %c0_i32_0 : i32, i32
  }
  func.func @transform_7(%arg0: i32, %arg1: i32) -> (i32, i32, i32) {
    %c0_i32 = arith.constant 0 : i32
    %c0_i32_0 = arith.constant 0 : i32
    return %arg0, %c0_i32, %arg1 : i32, i32, i32
  }
}

</mosaic_0001>

<llo_original>
// kernel: tpu_custom_call.1
$region0: #{tpu_custom_call.1}
  #allocation0 [shape = 'u32[]', space=smem, size = 0x4, offset = 0x4, fixed_abs, tag = 'smem constant byte address 0x4 - core index']
  #allocation1 [shape = 'u32[144,128]{1,0:T(1,128)}', space=vmem, size = 0x12000, scoped, tag = 'internal scratch']
  #allocation2 [shape = 'f32[32,128]{1,0:T(8,128)}', space=vmem, size = 0x4000, scoped, tag = 'scratch operand']
  #allocation3 [shape = 'f32[32,128]{1,0:T(8,128)}', space=vmem, size = 0x4000, scoped, tag = 'scratch operand']
  #allocation4 [shape = 'f32[32,16]{1,0:T(8,128)}', space=vmem, size = 0x4000, scoped, tag = 'scratch operand']
  %s0 = inlined_call_operand.vmem [shape: f32[2,32,16], index: 0, kind: input, shape index: {}]
  %s1 = inlined_call_operand.vmem [shape: f32[2,48,128], index: 1, kind: input, shape index: {}]
  %s2 = inlined_call_operand.vmem [shape: f32[32,32], index: 2, kind: input, shape index: {}]
  %s3 = inlined_call_operand.hbm [shape: f32[32,48], index: 3, kind: input, shape index: {}]
  %s4 = inlined_call_operand.hbm [shape: f32[32,48], index: 4, kind: input, shape index: {}]
  %s5 = inlined_call_operand.hbm [shape: f32[32,32], index: 5, kind: input, shape index: {}]
  %s6 = inlined_call_operand.vmem [shape: f32[32,1], index: 6, kind: input, shape index: {}]
  %s7 = inlined_call_operand.vmem [shape: f32[2,32,16], index: 7, kind: output, shape index: {}]
  %s8 = sld [smem:[#allocation0]]
  $region77: #{tpu_custom_call.1} parent=0
    _
  %s10 = ssub.s32 1, %s8
  %s11 = scalar_select 0, %s10, %s8
  $region1: #{tpu_custom_call.1} parent=0
    #allocation5 [shape = 'u8[16384]{0}', space=vmem, size = 0x4000, scoped, tag = 'input window, operand 3, single buffered']
    #allocation6 [shape = 's32[2]{0}', space=sflag, size = 0x8, scoped, tag = 'scoped memory for tpu_custom_call.1']
    #allocation7 [shape = 'u8[16384]{0}', space=vmem, size = 0x4000, scoped, tag = 'input window, operand 4, single buffered']
    #allocation8 [shape = 's32[1]{0}', space=sflag, size = 0x4, scoped, tag = 'scoped memory for tpu_custom_call.1']
    #allocation9 [shape = 'u8[16384]{0}', space=vmem, size = 0x4000, scoped, tag = 'input window, operand 5, single buffered']
    %12 = vsyncpa [#allocation6], 0
    %13 = vsyncpa [#allocation8], 0
    loop: start=0, step=1, limit=4
    $region2: #{tpu_custom_call.1} parent=1 // loop_pre_header
      _
    $region3: #{tpu_custom_call.1} parent=1 // loop_header
      %s15 = sphi 0, %s19
      %p16 = scmp.ge.s32.totalorder %s15, 4
      %s22 = sphi 0, %s34
      %s23 = sphi 0, %s30
      %s24 = sphi 0, %s22
      %s25 = sphi 0, %s23
      %s26 = sphi 0, %s24
      %s27 = sphi 0, %s25
      %s39 = sphi 0, %s41
      %s42 = sphi 0, %s39
      %s43 = sphi 0, %s42
      %s59 = sphi 0, %s43
      %s65 = sphi 0, %s67
      %s68 = sphi 0, %s65
      %s69 = sphi 0, %s68
      %s85 = sphi 0, %s69
      %s89 = sphi 0, %s89
      %s91 = sphi 0, %s89
      %s92 = sphi 0, %s91
      %s106 = sphi 0, %s92
      %s110 = sphi 0, %s110
      %s112 = sphi 0, %s110
      %s113 = sphi 0, %s112
      %s127 = sphi 0, %s113
      %s131 = sphi 0, %s131
      %s133 = sphi 0, %s131
      %s134 = sphi 0, %s133
      %s148 = sphi 0, %s134
      %s152 = sphi 0, %s152
      %s154 = sphi 0, %s152
      %s155 = sphi 0, %s154
      %s169 = sphi 0, %s155
      %s173 = sphi 0, %s173
      %s175 = sphi 0, %s173
      %s176 = sphi 0, %s175
      %s190 = sphi 0, %s176
      %s198 = sphi 0, %s200
      %s201 = sphi 0, %s198
      %s202 = sphi 0, %s201
      %s218 = sphi 0, %s202
    $region4: #{tpu_custom_call.1} parent=1 // loop_header_branch
      %18 = sbr.rel (%p16) target = $region8
    $region5: #{tpu_custom_call.1} parent=1 // loop_body
      %s20 = ssub.s32 %s15, 1
      %s21 = ssub.s32 %s15, 2
      %s28 = sadd.s32 1, %s23
      %p29 = scmp.ge.s32.totalorder %s28, 1
      %s30 = scalar_select %p29, 0, %s28
      %s31 = sadd.s32 1, %s22
      %s32 = scalar_select %p29, %s31, %s22
      %p33 = scmp.ge.s32.totalorder %s32, 2
      %s34 = scalar_select %p33, 0, %s32
      %s35 = ssub.s32 %s22, %s34
      %s36 = ssub.s32 %s23, %s30
      %s37 = sor.u32 %s35, %s36
      %p38 = scmp.eq.s32.totalorder %s37, 0
      %s40 = sadd.s32 %s39, 1
      %s41 = scalar_select %p38, %s39, %s40
      %p44 = pneg %p38
      %p45 = scmp.eq.s32.totalorder %s15, 1
      %p46 = por %p44, %p45
      %p47 = scmp.ne.s32.totalorder %s39, %s42
      %p48 = scmp.eq.s32.totalorder %s15, 0
      %p49 = por %p47, %p48
      %p50 = scmp.ne.s32.totalorder %s39, %s42
      %p51 = scmp.eq.s32.totalorder %s20, 1
      %p52 = por %p50, %p51
      %p53 = scmp.ne.s32.totalorder %s42, %s43
      %p54 = scmp.eq.s32.totalorder %s20, 0
      %p55 = por %p53, %p54
      %p56 = scmp.ne.s32.totalorder %s42, %s43
      %p57 = scmp.eq.s32.totalorder %s21, 1
      %p58 = por %p56, %p57
      %p60 = scmp.ne.s32.totalorder %s43, %s59
      %p61 = scmp.eq.s32.totalorder %s21, 0
      %p62 = por %p60, %p61
      %s63 = ssub.s32 %s22, %s34
      %p64 = scmp.eq.s32.totalorder %s63, 0
      %s66 = sadd.s32 %s65, 1
      %s67 = scalar_select %p64, %s65, %s66
      %p70 = pneg %p64
      %p71 = scmp.eq.s32.totalorder %s15, 1
      %p72 = por %p70, %p71
      %p73 = scmp.ne.s32.totalorder %s65, %s68
      %p74 = scmp.eq.s32.totalorder %s15, 0
      %p75 = por %p73, %p74
      %p76 = scmp.ne.s32.totalorder %s65, %s68
      %p77 = scmp.eq.s32.totalorder %s20, 1
      %p78 = por %p76, %p77
      %p79 = scmp.ne.s32.totalorder %s68, %s69
      %p80 = scmp.eq.s32.totalorder %s20, 0
      %p81 = por %p79, %p80
      %p82 = scmp.ne.s32.totalorder %s68, %s69
      %p83 = scmp.eq.s32.totalorder %s21, 1
      %p84 = por %p82, %p83
      %p86 = scmp.ne.s32.totalorder %s69, %s85
      %p87 = scmp.eq.s32.totalorder %s21, 0
      %p88 = por %p86, %p87
      %s90 = sadd.s32 %s89, 1
      %p93 = scmp.eq.s32.totalorder %s15, 1
      %p94 = scmp.ne.s32.totalorder %s89, %s91
      %p95 = scmp.eq.s32.totalorder %s15, 0
      %p96 = por %p94, %p95
      %p97 = scmp.ne.s32.totalorder %s89, %s91
      %p98 = scmp.eq.s32.totalorder %s20, 1
      %p99 = por %p97, %p98
      %p100 = scmp.ne.s32.totalorder %s91, %s92
      %p101 = scmp.eq.s32.totalorder %s20, 0
      %p102 = por %p100, %p101
      %p103 = scmp.ne.s32.totalorder %s91, %s92
      %p104 = scmp.eq.s32.totalorder %s21, 1
      %p105 = por %p103, %p104
      %p107 = scmp.ne.s32.totalorder %s92, %s106
      %p108 = scmp.eq.s32.totalorder %s21, 0
      %p109 = por %p107, %p108
      %s111 = sadd.s32 %s110, 1
      %p114 = scmp.eq.s32.totalorder %s15, 1
      %p115 = scmp.ne.s32.totalorder %s110, %s112
      %p116 = scmp.eq.s32.totalorder %s15, 0
      %p117 = por %p115, %p116
      %p118 = scmp.ne.s32.totalorder %s110, %s112
      %p119 = scmp.eq.s32.totalorder %s20, 1
      %p120 = por %p118, %p119
      %p121 = scmp.ne.s32.totalorder %s112, %s113
      %p122 = scmp.eq.s32.totalorder %s20, 0
      %p123 = por %p121, %p122
      %p124 = scmp.ne.s32.totalorder %s112, %s113
      %p125 = scmp.eq.s32.totalorder %s21, 1
      %p126 = por %p124, %p125
      %p128 = scmp.ne.s32.totalorder %s113, %s127
      %p129 = scmp.eq.s32.totalorder %s21, 0
      %p130 = por %p128, %p129
      %s132 = sadd.s32 %s131, 1
      %p135 = scmp.eq.s32.totalorder %s15, 1
      %p136 = scmp.ne.s32.totalorder %s131, %s133
      %p137 = scmp.eq.s32.totalorder %s15, 0
      %p138 = por %p136, %p137
      %p139 = scmp.ne.s32.totalorder %s131, %s133
      %p140 = scmp.eq.s32.totalorder %s20, 1
      %p141 = por %p139, %p140
      %p142 = scmp.ne.s32.totalorder %s133, %s134
      %p143 = scmp.eq.s32.totalorder %s20, 0
      %p144 = por %p142, %p143
      %p145 = scmp.ne.s32.totalorder %s133, %s134
      %p146 = scmp.eq.s32.totalorder %s21, 1
      %p147 = por %p145, %p146
      %p149 = scmp.ne.s32.totalorder %s134, %s148
      %p150 = scmp.eq.s32.totalorder %s21, 0
      %p151 = por %p149, %p150
      %s153 = sadd.s32 %s152, 1
      %p156 = scmp.eq.s32.totalorder %s15, 1
      %p157 = scmp.ne.s32.totalorder %s152, %s154
      %p158 = scmp.eq.s32.totalorder %s15, 0
      %p159 = por %p157, %p158
      %p160 = scmp.ne.s32.totalorder %s152, %s154
      %p161 = scmp.eq.s32.totalorder %s20, 1
      %p162 = por %p160, %p161
      %p163 = scmp.ne.s32.totalorder %s154, %s155
      %p164 = scmp.eq.s32.totalorder %s20, 0
      %p165 = por %p163, %p164
      %p166 = scmp.ne.s32.totalorder %s154, %s155
      %p167 = scmp.eq.s32.totalorder %s21, 1
      %p168 = por %p166, %p167
      %p170 = scmp.ne.s32.totalorder %s155, %s169
      %p171 = scmp.eq.s32.totalorder %s21, 0
      %p172 = por %p170, %p171
      %s174 = sadd.s32 %s173, 1
      %p177 = scmp.eq.s32.totalorder %s15, 1
      %p178 = scmp.ne.s32.totalorder %s173, %s175
      %p179 = scmp.eq.s32.totalorder %s15, 0
      %p180 = por %p178, %p179
      %p181 = scmp.ne.s32.totalorder %s173, %s175
      %p182 = scmp.eq.s32.totalorder %s20, 1
      %p183 = por %p181, %p182
      %p184 = scmp.ne.s32.totalorder %s175, %s176
      %p185 = scmp.eq.s32.totalorder %s20, 0
      %p186 = por %p184, %p185
      %p187 = scmp.ne.s32.totalorder %s175, %s176
      %p188 = scmp.eq.s32.totalorder %s21, 1
      %p189 = por %p187, %p188
      %p191 = scmp.ne.s32.totalorder %s176, %s190
      %p192 = scmp.eq.s32.totalorder %s21, 0
      %p193 = por %p191, %p192
      %s194 = ssub.s32 %s22, %s34
      %s195 = ssub.s32 %s23, %s30
      %s196 = sor.u32 %s194, %s195
      %p197 = scmp.eq.s32.totalorder %s196, 0
      %s199 = sadd.s32 %s198, 1
      %s200 = scalar_select %p197, %s198, %s199
      %p203 = pneg %p197
      %p204 = scmp.eq.s32.totalorder %s15, 1
      %p205 = por %p203, %p204
      %p206 = scmp.ne.s32.totalorder %s198, %s201
      %p207 = scmp.eq.s32.totalorder %s15, 0
      %p208 = por %p206, %p207
      %p209 = scmp.ne.s32.totalorder %s198, %s201
      %p210 = scmp.eq.s32.totalorder %s20, 1
      %p211 = por %p209, %p210
      %p212 = scmp.ne.s32.totalorder %s201, %s202
      %p213 = scmp.eq.s32.totalorder %s20, 0
      %p214 = por %p212, %p213
      %p215 = scmp.ne.s32.totalorder %s201, %s202
      %p216 = scmp.eq.s32.totalorder %s21, 1
      %p217 = por %p215, %p216
      %p219 = scmp.ne.s32.totalorder %s202, %s218
      %p220 = scmp.eq.s32.totalorder %s21, 0
      %p221 = por %p219, %p220
      %p222 = scmp.le.s32.totalorder 1, %s15
      %p223 = scmp.lt.s32.totalorder %s15, 3
      %p224 = pnand %p222, %p223
      %p225 = pneg %p224
      // Predicated region
      $region9: #{tpu_custom_call.1} parent=5 // pred_check
        _
      $region10: #{tpu_custom_call.1} parent=5 // pred_check_branch
        %227 = sbr.rel (%p224) target = $region12
      $region11: #{tpu_custom_call.1} parent=5 // pred_region
        %s228 = ssub.s32 %s15, 1
        // Predicated region
        $region13: #{tpu_custom_call.1} parent=11 // pred_check
          %p229 = pneg %p102
        $region14: #{tpu_custom_call.1} parent=11 // pred_check_branch
          %231 = sbr.rel (%p229) target = $region16
        $region15: #{tpu_custom_call.1} parent=11 // pred_region
          _
        $region16: #{tpu_custom_call.1} parent=11 // pred_fallthru
          _
        // Predicated region
        $region17: #{tpu_custom_call.1} parent=11 // pred_check
          %p232 = pneg %p123
        $region18: #{tpu_custom_call.1} parent=11 // pred_check_branch
          %234 = sbr.rel (%p232) target = $region20
        $region19: #{tpu_custom_call.1} parent=11 // pred_region
          %s236 = ssub.s32 512, 512
          %237 = vsyncadd [#allocation6], %s236
          %s238 = sshll.u32 [#allocation5], 4
          %s239 = int_to_ptr.vmem [resolvable:$true] %s238
          %244 = dma.hbm_to_vmem [thread:$0]  %s3, 512, %s239, [#allocation6], 128, 128, 8
        $region20: #{tpu_custom_call.1} parent=11 // pred_fallthru
          _
        // Predicated region
        $region21: #{tpu_custom_call.1} parent=11 // pred_check
          %p245 = pneg %p144
        $region22: #{tpu_custom_call.1} parent=11 // pred_check_branch
          %247 = sbr.rel (%p245) target = $region24
        $region23: #{tpu_custom_call.1} parent=11 // pred_region
          %s249 = ssub.s32 512, 512
          %250 = vsyncadd [#allocation8], %s249
          %s251 = sshll.u32 [#allocation7], 4
          %s252 = int_to_ptr.vmem [resolvable:$true] %s251
          %257 = dma.hbm_to_vmem [thread:$0]  %s4, 512, %s252, [#allocation8], 128, 128, 8
        $region24: #{tpu_custom_call.1} parent=11 // pred_fallthru
          _
        // Predicated region
        $region25: #{tpu_custom_call.1} parent=11 // pred_check
          %p258 = pneg %p165
        $region26: #{tpu_custom_call.1} parent=11 // pred_check_branch
          %260 = sbr.rel (%p258) target = $region28
        $region27: #{tpu_custom_call.1} parent=11 // pred_region
          %s262 = ssub.s32 512, 512
          %263 = vsyncadd [#allocation8], %s262
          %s264 = sshll.u32 [#allocation9], 4
          %s265 = int_to_ptr.vmem [resolvable:$true] %s264
          %270 = dma.hbm_to_vmem [thread:$0]  %s5, 512, %s265, [#allocation8], 128, 128, 8
        $region28: #{tpu_custom_call.1} parent=11 // pred_fallthru
          _
        // Predicated region
        $region29: #{tpu_custom_call.1} parent=11 // pred_check
          %p271 = pneg %p186
        $region30: #{tpu_custom_call.1} parent=11 // pred_check_branch
          %273 = sbr.rel (%p271) target = $region32
        $region31: #{tpu_custom_call.1} parent=11 // pred_region
          _
        $region32: #{tpu_custom_call.1} parent=11 // pred_fallthru
          _
      $region12: #{tpu_custom_call.1} parent=5 // pred_fallthru
        _
      %p274 = scmp.lt.s32.totalorder %s15, 2
      // Predicated region
      $region33: #{tpu_custom_call.1} parent=5 // pred_check
        %p275 = pneg %p274
      $region34: #{tpu_custom_call.1} parent=5 // pred_check_branch
        %277 = sbr.rel (%p275) target = $region36
      $region35: #{tpu_custom_call.1} parent=5 // pred_region
        // Predicated region
        $region37: #{tpu_custom_call.1} parent=35 // pred_check
          %p278 = pneg %p49
        $region38: #{tpu_custom_call.1} parent=35 // pred_check_branch
          %280 = sbr.rel (%p278) target = $region40
        $region39: #{tpu_custom_call.1} parent=35 // pred_region
          %p281 = scmp.lt.s32.totalorder %s22, 1
          %s282 = scalar_select %p281, %s22, 1
          %p283 = scmp.lt.s32.totalorder %s23, 0
          %s284 = scalar_select %p283, %s23, 0
          %s285 = smul.addr %s282, 4
          %s286 = sadd.s32 %s284, %s285
          %s287 = smul.addr %s286, 8
          %s288 = scalar_lea.vmem %s0, %s287
        $region40: #{tpu_custom_call.1} parent=35 // pred_fallthru
          _
        // Predicated region
        $region41: #{tpu_custom_call.1} parent=35 // pred_check
          %p289 = pneg %p75
        $region42: #{tpu_custom_call.1} parent=35 // pred_check_branch
          %291 = sbr.rel (%p289) target = $region44
        $region43: #{tpu_custom_call.1} parent=35 // pred_region
          %p292 = scmp.lt.s32.totalorder %s22, 1
          %s293 = scalar_select %p292, %s22, 1
          %s294 = smul.addr %s293, 6
          %s295 = smul.addr %s294, 8
          %s296 = scalar_lea.vmem %s1, %s295
        $region44: #{tpu_custom_call.1} parent=35 // pred_fallthru
          _
      $region36: #{tpu_custom_call.1} parent=5 // pred_fallthru
        _
      %p297 = scmp.le.s32.totalorder 1, %s15
      %p298 = scmp.lt.s32.totalorder %s15, 3
      %p299 = pnand %p297, %p298
      %p300 = pneg %p299
      // Predicated region
      $region45: #{tpu_custom_call.1} parent=5 // pred_check
        _
      $region46: #{tpu_custom_call.1} parent=5 // pred_check_branch
        %302 = sbr.rel (%p299) target = $region48
      $region47: #{tpu_custom_call.1} parent=5 // pred_region
        %s303 = ssub.s32 %s15, 1
        // Predicated region
        $region49: #{tpu_custom_call.1} parent=47 // pred_check
          %p304 = pneg %p123
        $region50: #{tpu_custom_call.1} parent=47 // pred_check_branch
          %306 = sbr.rel (%p304) target = $region52
        $region51: #{tpu_custom_call.1} parent=47 // pred_region
          %307 = dma.done [#allocation6], 512
        $region52: #{tpu_custom_call.1} parent=47 // pred_fallthru
          _
        // Predicated region
        $region53: #{tpu_custom_call.1} parent=47 // pred_check
          %p308 = pneg %p144
        $region54: #{tpu_custom_call.1} parent=47 // pred_check_branch
          %310 = sbr.rel (%p308) target = $region56
        $region55: #{tpu_custom_call.1} parent=47 // pred_region
          %311 = dma.done [#allocation8], 512
        $region56: #{tpu_custom_call.1} parent=47 // pred_fallthru
          _
        // Predicated region
        $region57: #{tpu_custom_call.1} parent=47 // pred_check
          %p312 = pneg %p165
        $region58: #{tpu_custom_call.1} parent=47 // pred_check_branch
          %314 = sbr.rel (%p312) target = $region60
        $region59: #{tpu_custom_call.1} parent=47 // pred_region
          %315 = dma.done [#allocation8], 512
        $region60: #{tpu_custom_call.1} parent=47 // pred_fallthru
          _
        %p316 = scmp.lt.s32.totalorder %s24, 1
        %s317 = scalar_select %p316, %s24, 1
        %p318 = scmp.lt.s32.totalorder %s25, 0
        %s319 = scalar_select %p318, %s25, 0
        %s320 = smul.addr %s317, 4
        %s321 = sadd.s32 %s319, %s320
        %s322 = smul.addr %s321, 8
        %s323 = scalar_lea.vmem %s0, %s322
        %p324 = pneg %p55
        %p325 = pneg %p52
        %p326 = scmp.lt.s32.totalorder %s24, 1
        %s327 = scalar_select %p326, %s24, 1
        %s328 = smul.addr %s327, 6
        %s329 = smul.addr %s328, 8
        %s330 = scalar_lea.vmem %s1, %s329
        %p331 = pneg %p81
        %p332 = pneg %p78
        %p333 = pneg %p102
        %p334 = pneg %p99
        %p335 = pneg %p123
        %p336 = pneg %p120
        %p337 = pneg %p144
        %p338 = pneg %p141
        %p339 = pneg %p165
        %p340 = pneg %p162
        %p341 = pneg %p186
        %p342 = pneg %p183
        %p343 = pneg %p214
        %p344 = pneg %p211
        %p345 = scmp.lt.s32.totalorder %s24, 1
        %s346 = scalar_select %p345, %s24, 1
        %p347 = scmp.lt.s32.totalorder %s25, 0
        %s348 = scalar_select %p347, %s25, 0
        %s349 = smul.addr %s346, 4
        %s350 = sadd.s32 %s348, %s349
        %s351 = smul.addr %s350, 8
        %s352 = scalar_lea.vmem %s7, %s351
        %p353 = scmp.lt.s32.totalorder %s24, 1
        %s354 = scalar_select %p353, %s24, 1
        %p355 = scmp.lt.s32.totalorder %s25, 0
        %s356 = scalar_select %p355, %s25, 0
        %s357 = smul.addr %s354, 4
        %s358 = sadd.s32 %s356, %s357
        %s359 = smul.addr %s358, 8
        %s360 = scalar_lea.vmem %s0, %s359
        %p361 = scmp.lt.s32.totalorder %s24, 1
        %s362 = scalar_select %p361, %s24, 1
        %s363 = smul.addr %s362, 6
        %s364 = smul.addr %s363, 8
        %s365 = scalar_lea.vmem %s1, %s364
        %p366 = scmp.lt.s32.totalorder %s24, 1
        %s367 = scalar_select %p366, %s24, 1
        %p368 = scmp.lt.s32.totalorder %s25, 0
        %s369 = scalar_select %p368, %s25, 0
        %s370 = smul.addr %s367, 4
        %s371 = sadd.s32 %s369, %s370
        %s372 = smul.addr %s371, 8
        %s373 = scalar_lea.vmem %s7, %s372
        %p374 = scmp.eq.s32.totalorder %s25, 0
        // Predicated region
        $region61: #{tpu_custom_call.1} parent=47 // pred_check
          %p375 = pneg %p374
        $region62: #{tpu_custom_call.1} parent=47 // pred_check_branch
          %377 = sbr.rel (%p375) target = $region64
        $region63: #{tpu_custom_call.1} parent=47 // pred_region
          %v378 = vld [vmem:[%s365] sm:$0xff]
          %v379 = vld [vmem:[%s365 + $0x8] sm:$0xff]
          %v380 = vld [vmem:[%s365 + $0x10] sm:$0xff]
          %v381 = vld [vmem:[%s365 + $0x18] sm:$0xff]
          %v382 = vld [vmem:[%s365 + $0x20] sm:$0xff]
          %v383 = vld [vmem:[%s365 + $0x28] sm:$0xff]
          %v384 = vld [vmem:[#allocation5] sm:$0xff]
          %v385 = vld [vmem:[#allocation5 + $0x8] sm:$0xff]
          %v386 = vld [vmem:[#allocation5 + $0x10] sm:$0xff]
          %v387 = vld [vmem:[#allocation5 + $0x18] sm:$0xff]
          %vm388 = vcmask 392192
          %v390 = vsel %vm388, %v384, 0
          %v393 = vsel %vm388, %v385, 0
          %v396 = vsel %vm388, %v386, 0
          %v399 = vsel %vm388, %v387, 0
          %401 = vmatprep.subr.mxu0 0.0
          %402 = vmatpush1.msra.mxu0 0.0
          %403 = vmatprep.subr.mxu0 0.0
          %404 = vmatpush1.msra.mxu0 0.0
          %405 = vmatprep.subr.mxu0 0.0
          %406 = vmatpush1.msra.mxu0 0.0
          %407 = vmatprep.subr.mxu0 0.0
          %408 = vmatpush1.msra.mxu0 0.0
          %409 = vmatprep.subr.mxu0 0.0
          %410 = vmatpush1.msra.mxu0 0.0
          %411 = vmatprep.subr.mxu0 0.0
          %412 = vmatpush1.msra.mxu0 0.0
          %413 = vmatprep.subr.mxu0 0.0
          %414 = vmatpush1.msra.mxu0 0.0
          %415 = vmatprep.subr.mxu0 0.0
          %416 = vmatpush1.msra.mxu0 0.0
          %417 = vmatprep.subr.mxu0 0.0
          %418 = vmatpush1.msra.mxu0 0.0
          %419 = vmatprep.subr.mxu0 0.0
          %420 = vmatpush1.msra.mxu0 0.0
          %421 = vmatprep.subr.mxu0 0.0
          %422 = vmatpush1.msra.mxu0 %v383
          %423 = vmatprep.subr.mxu0 0.0
          %424 = vmatpush1.msra.mxu0 %v382
          %425 = vmatprep.subr.mxu0 0.0
          %426 = vmatpush1.msra.mxu0 %v381
          %427 = vmatprep.subr.mxu0 0.0
          %428 = vmatpush1.msra.mxu0 %v380
          %429 = vmatprep.subr.mxu0 0.0
          %430 = vmatpush1.msra.mxu0 %v379
          %431 = vmatprep.subr.mxu0 0.0
          %432 = vmatpush1.msra.mxu0 %v378
          %433 = vmatprep.subr.mxu0 0.0
          %434 = vmatpush2.msra.mxu0 0.0
          %435 = vmatprep.subr.mxu0 0.0
          %436 = vmatpush2.msra.mxu0 0.0
          %437 = vmatprep.subr.mxu0 0.0
          %438 = vmatpush2.msra.mxu0 0.0
          %439 = vmatprep.subr.mxu0 0.0
          %440 = vmatpush2.msra.mxu0 0.0
          %441 = vmatprep.subr.mxu0 0.0
          %442 = vmatpush2.msra.mxu0 0.0
          %443 = vmatprep.subr.mxu0 0.0
          %444 = vmatpush2.msra.mxu0 0.0
          %445 = vmatprep.subr.mxu0 0.0
          %446 = vmatpush2.msra.mxu0 0.0
          %447 = vmatprep.subr.mxu0 0.0
          %448 = vmatpush2.msra.mxu0 0.0
          %449 = vmatprep.subr.mxu0 0.0
          %450 = vmatpush2.msra.mxu0 0.0
          %451 = vmatprep.subr.mxu0 0.0
          %452 = vmatpush2.msra.mxu0 0.0
          %453 = vmatprep.subr.mxu0 0.0
          %454 = vmatpush2.msra.mxu0 0.0
          %455 = vmatprep.subr.mxu0 0.0
          %456 = vmatpush2.msra.mxu0 0.0
          %457 = vmatprep.subr.mxu0 0.0
          %458 = vmatpush2.msra.mxu0 0.0
          %459 = vmatprep.subr.mxu0 0.0
          %460 = vmatpush2.msra.mxu0 0.0
          %461 = vmatprep.subr.mxu0 0.0
          %462 = vmatpush2.msra.mxu0 0.0
          %463 = vmatprep.subr.mxu0 0.0
          %464 = vmatpush2.msra.mxu0 0.0
          %465 = vmatprep.mubr.f32.mxu0 0.0
          %466 = vmatmul.mubr.f32.gmra.mxu0 %v390
          %v467 = vpop.f32.mrf.mxu0
          %v468 = vadd.f32 0.0, %v467
          %v469 = vpop.f32.mrf.mxu0
          %470 = vmatprep.mubr.f32.mxu0 0.0
          %471 = vmatmul.mubr.f32.gmra.mxu0 %v393
          %v472 = vpop.f32.mrf.mxu0
          %v473 = vadd.f32 0.0, %v472
          %v474 = vpop.f32.mrf.mxu0
          %475 = vmatprep.mubr.f32.mxu0 0.0
          %476 = vmatmul.mubr.f32.gmra.mxu0 %v396
          %v477 = vpop.f32.mrf.mxu0
          %v478 = vadd.f32 0.0, %v477
          %v479 = vpop.f32.mrf.mxu0
          %480 = vmatprep.mubr.f32.mxu0 0.0
          %481 = vmatmul.mubr.f32.gmra.mxu0 %v399
          %v482 = vpop.f32.mrf.mxu0
          %v483 = vadd.f32 0.0, %v482
          %v484 = vpop.f32.mrf.mxu0
          %485 = vdwg.mxu0
          %486 = vst [vmem:[#allocation2] sm:$0xff] %v468
          %487 = vst [vmem:[#allocation2 + $0x8] sm:$0xff] %v473
          %488 = vst [vmem:[#allocation2 + $0x10] sm:$0xff] %v478
          %489 = vst [vmem:[#allocation2 + $0x18] sm:$0xff] %v483
          %v490 = vld [vmem:[#allocation7] sm:$0xff]
          %v491 = vld [vmem:[#allocation7 + $0x8] sm:$0xff]
          %v492 = vld [vmem:[#allocation7 + $0x10] sm:$0xff]
          %v493 = vld [vmem:[#allocation7 + $0x18] sm:$0xff]
          %v495 = vsel %vm388, %v490, 0
          %v498 = vsel %vm388, %v491, 0
          %v501 = vsel %vm388, %v492, 0
          %v504 = vsel %vm388, %v493, 0
          %506 = vmatprep.subr.mxu0 0.0
          %507 = vmatpush1.msra.mxu0 0.0
          %508 = vmatprep.subr.mxu0 0.0
          %509 = vmatpush1.msra.mxu0 0.0
          %510 = vmatprep.subr.mxu0 0.0
          %511 = vmatpush1.msra.mxu0 0.0
          %512 = vmatprep.subr.mxu0 0.0
          %513 = vmatpush1.msra.mxu0 0.0
          %514 = vmatprep.subr.mxu0 0.0
          %515 = vmatpush1.msra.mxu0 0.0
          %516 = vmatprep.subr.mxu0 0.0
          %517 = vmatpush1.msra.mxu0 0.0
          %518 = vmatprep.subr.mxu0 0.0
          %519 = vmatpush1.msra.mxu0 0.0
          %520 = vmatprep.subr.mxu0 0.0
          %521 = vmatpush1.msra.mxu0 0.0
          %522 = vmatprep.subr.mxu0 0.0
          %523 = vmatpush1.msra.mxu0 0.0
          %524 = vmatprep.subr.mxu0 0.0
          %525 = vmatpush1.msra.mxu0 0.0
          %526 = vmatprep.subr.mxu0 0.0
          %527 = vmatpush1.msra.mxu0 %v383
          %528 = vmatprep.subr.mxu0 0.0
          %529 = vmatpush1.msra.mxu0 %v382
          %530 = vmatprep.subr.mxu0 0.0
          %531 = vmatpush1.msra.mxu0 %v381
          %532 = vmatprep.subr.mxu0 0.0
          %533 = vmatpush1.msra.mxu0 %v380
          %534 = vmatprep.subr.mxu0 0.0
          %535 = vmatpush1.msra.mxu0 %v379
          %536 = vmatprep.subr.mxu0 0.0
          %537 = vmatpush1.msra.mxu0 %v378
          %538 = vmatprep.subr.mxu0 0.0
          %539 = vmatpush2.msra.mxu0 0.0
          %540 = vmatprep.subr.mxu0 0.0
          %541 = vmatpush2.msra.mxu0 0.0
          %542 = vmatprep.subr.mxu0 0.0
          %543 = vmatpush2.msra.mxu0 0.0
          %544 = vmatprep.subr.mxu0 0.0
          %545 = vmatpush2.msra.mxu0 0.0
          %546 = vmatprep.subr.mxu0 0.0
          %547 = vmatpush2.msra.mxu0 0.0
          %548 = vmatprep.subr.mxu0 0.0
          %549 = vmatpush2.msra.mxu0 0.0
          %550 = vmatprep.subr.mxu0 0.0
          %551 = vmatpush2.msra.mxu0 0.0
          %552 = vmatprep.subr.mxu0 0.0
          %553 = vmatpush2.msra.mxu0 0.0
          %554 = vmatprep.subr.mxu0 0.0
          %555 = vmatpush2.msra.mxu0 0.0
          %556 = vmatprep.subr.mxu0 0.0
          %557 = vmatpush2.msra.mxu0 0.0
          %558 = vmatprep.subr.mxu0 0.0
          %559 = vmatpush2.msra.mxu0 0.0
          %560 = vmatprep.subr.mxu0 0.0
          %561 = vmatpush2.msra.mxu0 0.0
          %562 = vmatprep.subr.mxu0 0.0
          %563 = vmatpush2.msra.mxu0 0.0
          %564 = vmatprep.subr.mxu0 0.0
          %565 = vmatpush2.msra.mxu0 0.0
          %566 = vmatprep.subr.mxu0 0.0
          %567 = vmatpush2.msra.mxu0 0.0
          %568 = vmatprep.subr.mxu0 0.0
          %569 = vmatpush2.msra.mxu0 0.0
          %570 = vmatprep.mubr.f32.mxu0 0.0
          %571 = vmatmul.mubr.f32.gmra.mxu0 %v495
          %v572 = vpop.f32.mrf.mxu0
          %v573 = vadd.f32 0.0, %v572
          %v574 = vpop.f32.mrf.mxu0
          %575 = vmatprep.mubr.f32.mxu0 0.0
          %576 = vmatmul.mubr.f32.gmra.mxu0 %v498
          %v577 = vpop.f32.mrf.mxu0
          %v578 = vadd.f32 0.0, %v577
          %v579 = vpop.f32.mrf.mxu0
          %580 = vmatprep.mubr.f32.mxu0 0.0
          %581 = vmatmul.mubr.f32.gmra.mxu0 %v501
          %v582 = vpop.f32.mrf.mxu0
          %v583 = vadd.f32 0.0, %v582
          %v584 = vpop.f32.mrf.mxu0
          %585 = vmatprep.mubr.f32.mxu0 0.0
          %586 = vmatmul.mubr.f32.gmra.mxu0 %v504
          %v587 = vpop.f32.mrf.mxu0
          %v588 = vadd.f32 0.0, %v587
          %v589 = vpop.f32.mrf.mxu0
          %590 = vdwg.mxu0
          %591 = vst [vmem:[#allocation3] sm:$0xff] %v573
          %592 = vst [vmem:[#allocation3 + $0x8] sm:$0xff] %v578
          %593 = vst [vmem:[#allocation3 + $0x10] sm:$0xff] %v583
          %594 = vst [vmem:[#allocation3 + $0x18] sm:$0xff] %v588
        $region64: #{tpu_custom_call.1} parent=47 // pred_fallthru
          _
        %v595 = vld [vmem:[%s360] sm:$0xff]
        %v596 = vld [vmem:[%s360 + $0x8] sm:$0xff]
        %v597 = vld [vmem:[%s360 + $0x10] sm:$0xff]
        %v598 = vld [vmem:[%s360 + $0x18] sm:$0xff]
        %v599 = vld [vmem:[%s2] sm:$0xff]
        %v600 = vld [vmem:[%s2 + $0x8] sm:$0xff]
        %v601 = vld [vmem:[%s2 + $0x10] sm:$0xff]
        %v602 = vld [vmem:[%s2 + $0x18] sm:$0xff]
        %vm603 = vcmask 261120
        %v605 = vsel %vm603, %v599, 0
        %v608 = vsel %vm603, %v600, 0
        %v611 = vsel %vm603, %v601, 0
        %v614 = vsel %vm603, %v602, 0
        %616 = vmatprep.subr.mxu0 0.0
        %617 = vmatpush1.msra.mxu0 0.0
        %618 = vmatprep.subr.mxu0 0.0
        %619 = vmatpush1.msra.mxu0 0.0
        %620 = vmatprep.subr.mxu0 0.0
        %621 = vmatpush1.msra.mxu0 0.0
        %622 = vmatprep.subr.mxu0 0.0
        %623 = vmatpush1.msra.mxu0 0.0
        %624 = vmatprep.subr.mxu0 0.0
        %625 = vmatpush1.msra.mxu0 0.0
        %626 = vmatprep.subr.mxu0 0.0
        %627 = vmatpush1.msra.mxu0 0.0
        %628 = vmatprep.subr.mxu0 0.0
        %629 = vmatpush1.msra.mxu0 0.0
        %630 = vmatprep.subr.mxu0 0.0
        %631 = vmatpush1.msra.mxu0 0.0
        %632 = vmatprep.subr.mxu0 0.0
        %633 = vmatpush1.msra.mxu0 0.0
        %634 = vmatprep.subr.mxu0 0.0
        %635 = vmatpush1.msra.mxu0 0.0
        %636 = vmatprep.subr.mxu0 0.0
        %637 = vmatpush1.msra.mxu0 0.0
        %638 = vmatprep.subr.mxu0 0.0
        %639 = vmatpush1.msra.mxu0 0.0
        %640 = vmatprep.subr.mxu0 0.0
        %641 = vmatpush1.msra.mxu0 %v598
        %642 = vmatprep.subr.mxu0 0.0
        %643 = vmatpush1.msra.mxu0 %v597
        %644 = vmatprep.subr.mxu0 0.0
        %645 = vmatpush1.msra.mxu0 %v596
        %646 = vmatprep.subr.mxu0 0.0
        %647 = vmatpush1.msra.mxu0 %v595
        %648 = vmatprep.subr.mxu0 0.0
        %649 = vmatpush2.msra.mxu0 0.0
        %650 = vmatprep.subr.mxu0 0.0
        %651 = vmatpush2.msra.mxu0 0.0
        %652 = vmatprep.subr.mxu0 0.0
        %653 = vmatpush2.msra.mxu0 0.0
        %654 = vmatprep.subr.mxu0 0.0
        %655 = vmatpush2.msra.mxu0 0.0
        %656 = vmatprep.subr.mxu0 0.0
        %657 = vmatpush2.msra.mxu0 0.0
        %658 = vmatprep.subr.mxu0 0.0
        %659 = vmatpush2.msra.mxu0 0.0
        %660 = vmatprep.subr.mxu0 0.0
        %661 = vmatpush2.msra.mxu0 0.0
        %662 = vmatprep.subr.mxu0 0.0
        %663 = vmatpush2.msra.mxu0 0.0
        %664 = vmatprep.subr.mxu0 0.0
        %665 = vmatpush2.msra.mxu0 0.0
        %666 = vmatprep.subr.mxu0 0.0
        %667 = vmatpush2.msra.mxu0 0.0
        %668 = vmatprep.subr.mxu0 0.0
        %669 = vmatpush2.msra.mxu0 0.0
        %670 = vmatprep.subr.mxu0 0.0
        %671 = vmatpush2.msra.mxu0 0.0
        %672 = vmatprep.subr.mxu0 0.0
        %673 = vmatpush2.msra.mxu0 0.0
        %674 = vmatprep.subr.mxu0 0.0
        %675 = vmatpush2.msra.mxu0 0.0
        %676 = vmatprep.subr.mxu0 0.0
        %677 = vmatpush2.msra.mxu0 0.0
        %678 = vmatprep.subr.mxu0 0.0
        %679 = vmatpush2.msra.mxu0 0.0
        %680 = vmatprep.mubr.f32.mxu0 0.0
        %681 = vmatmul.mubr.f32.gmra.mxu0 %v605
        %v682 = vpop.f32.mrf.mxu0
        %v683 = vadd.f32 0.0, %v682
        %v684 = vpop.f32.mrf.mxu0
        %685 = vmatprep.mubr.f32.mxu0 0.0
        %686 = vmatmul.mubr.f32.gmra.mxu0 %v608
        %v687 = vpop.f32.mrf.mxu0
        %v688 = vadd.f32 0.0, %v687
        %v689 = vpop.f32.mrf.mxu0
        %690 = vmatprep.mubr.f32.mxu0 0.0
        %691 = vmatmul.mubr.f32.gmra.mxu0 %v611
        %v692 = vpop.f32.mrf.mxu0
        %v693 = vadd.f32 0.0, %v692
        %v694 = vpop.f32.mrf.mxu0
        %695 = vmatprep.mubr.f32.mxu0 0.0
        %696 = vmatmul.mubr.f32.gmra.mxu0 %v614
        %v697 = vpop.f32.mrf.mxu0
        %v698 = vadd.f32 0.0, %v697
        %v699 = vpop.f32.mrf.mxu0
        %700 = vdwg.mxu0
        %v701 = vlaneseq
        %v702 = vand.u32 %v701, 127
        %vm703 = vcmp.lt.s32.totalorder %v702, 8
        %v704 = vsel %vm703, 0.0, -1e+09
        %v705 = vld [vmem:[#allocation2] sm:$0xff]
        %v706 = vld [vmem:[#allocation3] sm:$0xff]
        %707 = vxpose.xlu0.b32.start [1/16] %v683, 128
        %708 = vxpose.xlu0.b32.cont [2/16] 0.0, 128
        %709 = vxpose.xlu0.b32.cont [3/16] 0.0, 128
        %710 = vxpose.xlu0.b32.cont [4/16] 0.0, 128
        %711 = vxpose.xlu0.b32.cont [5/16] 0.0, 128
        %712 = vxpose.xlu0.b32.cont [6/16] 0.0, 128
        %713 = vxpose.xlu0.b32.cont [7/16] 0.0, 128
        %714 = vxpose.xlu0.b32.cont [8/16] 0.0, 128
        %715 = vxpose.xlu0.b32.cont [9/16] 0.0, 128
        %716 = vxpose.xlu0.b32.cont [10/16] 0.0, 128
        %717 = vxpose.xlu0.b32.cont [11/16] 0.0, 128
        %718 = vxpose.xlu0.b32.cont [12/16] 0.0, 128
        %719 = vxpose.xlu0.b32.cont [13/16] 0.0, 128
        %720 = vxpose.xlu0.b32.cont [14/16] 0.0, 128
        %721 = vxpose.xlu0.b32.cont [15/16] 0.0, 128
        %722 = vxpose.xlu0.b32.end [16/16] 0.0, 128
        %v723 = vpop.trf.xlu0
        %v724 = vpop.trf.xlu0
        %v725 = vpop.trf.xlu0
        %v726 = vpop.trf.xlu0
        %v727 = vpop.trf.xlu0
        %v728 = vpop.trf.xlu0
        %v729 = vpop.trf.xlu0
        %v730 = vpop.trf.xlu0
        %v731 = vpop.trf.xlu0
        %v732 = vpop.trf.xlu0
        %v733 = vpop.trf.xlu0
        %v734 = vpop.trf.xlu0
        %v735 = vpop.trf.xlu0
        %v736 = vpop.trf.xlu0
        %v737 = vpop.trf.xlu0
        %v738 = vpop.trf.xlu0
        %vm739 = vcmask 64512
        %v741 = vsel %vm739, %v723, 0
        %v744 = vsel %vm739, %v724, 0
        %746 = vmatprep.subr.mxu0 0.0
        %747 = vmatpush1.msra.mxu0 0.0
        %748 = vmatprep.subr.mxu0 0.0
        %749 = vmatpush1.msra.mxu0 0.0
        %750 = vmatprep.subr.mxu0 0.0
        %751 = vmatpush1.msra.mxu0 0.0
        %752 = vmatprep.subr.mxu0 0.0
        %753 = vmatpush1.msra.mxu0 0.0
        %754 = vmatprep.subr.mxu0 0.0
        %755 = vmatpush1.msra.mxu0 0.0
        %756 = vmatprep.subr.mxu0 0.0
        %757 = vmatpush1.msra.mxu0 0.0
        %758 = vmatprep.subr.mxu0 0.0
        %759 = vmatpush1.msra.mxu0 0.0
        %760 = vmatprep.subr.mxu0 0.0
        %761 = vmatpush1.msra.mxu0 0.0
        %762 = vmatprep.subr.mxu0 0.0
        %763 = vmatpush1.msra.mxu0 0.0
        %764 = vmatprep.subr.mxu0 0.0
        %765 = vmatpush1.msra.mxu0 0.0
        %766 = vmatprep.subr.mxu0 0.0
        %767 = vmatpush1.msra.mxu0 0.0
        %768 = vmatprep.subr.mxu0 0.0
        %769 = vmatpush1.msra.mxu0 0.0
        %770 = vmatprep.subr.mxu0 0.0
        %771 = vmatpush1.msra.mxu0 0.0
        %772 = vmatprep.subr.mxu0 0.0
        %773 = vmatpush1.msra.mxu0 0.0
        %774 = vmatprep.subr.mxu0 0.0
        %775 = vmatpush1.msra.mxu0 0.0
        %776 = vmatprep.subr.mxu0 0.0
        %777 = vmatpush1.msra.mxu0 %v705
        %778 = vmatprep.subr.mxu0 0.0
        %779 = vmatpush2.msra.mxu0 0.0
        %780 = vmatprep.subr.mxu0 0.0
        %781 = vmatpush2.msra.mxu0 0.0
        %782 = vmatprep.subr.mxu0 0.0
        %783 = vmatpush2.msra.mxu0 0.0
        %784 = vmatprep.subr.mxu0 0.0
        %785 = vmatpush2.msra.mxu0 0.0
        %786 = vmatprep.subr.mxu0 0.0
        %787 = vmatpush2.msra.mxu0 0.0
        %788 = vmatprep.subr.mxu0 0.0
        %789 = vmatpush2.msra.mxu0 0.0
        %790 = vmatprep.subr.mxu0 0.0
        %791 = vmatpush2.msra.mxu0 0.0
        %792 = vmatprep.subr.mxu0 0.0
        %793 = vmatpush2.msra.mxu0 0.0
        %794 = vmatprep.subr.mxu0 0.0
        %795 = vmatpush2.msra.mxu0 0.0
        %796 = vmatprep.subr.mxu0 0.0
        %797 = vmatpush2.msra.mxu0 0.0
        %798 = vmatprep.subr.mxu0 0.0
        %799 = vmatpush2.msra.mxu0 0.0
        %800 = vmatprep.subr.mxu0 0.0
        %801 = vmatpush2.msra.mxu0 0.0
        %802 = vmatprep.subr.mxu0 0.0
        %803 = vmatpush2.msra.mxu0 0.0
        %804 = vmatprep.subr.mxu0 0.0
        %805 = vmatpush2.msra.mxu0 0.0
        %806 = vmatprep.subr.mxu0 0.0
        %807 = vmatpush2.msra.mxu0 0.0
        %808 = vmatprep.subr.mxu0 0.0
        %809 = vmatpush2.msra.mxu0 0.0
        %810 = vmatprep.mubr.f32.mxu0 0.0
        %811 = vmatmul.mubr.f32.gmra.mxu0 %v741
        %v812 = vpop.f32.mrf.mxu0
        %v813 = vadd.f32 %v704, %v812
        %v814 = vpop.f32.mrf.mxu0
        %815 = vmatprep.mubr.f32.mxu0 0.0
        %816 = vmatmul.mubr.f32.gmra.mxu0 %v744
        %v817 = vpop.f32.mrf.mxu0
        %v818 = vadd.f32 %v704, %v817
        %v819 = vpop.f32.mrf.mxu0
        %820 = vdwg.mxu0
        %821 = vmax.xlane.f32.xlu0 %v813
        %v822 = vpop.xlane.xlu0 %821
        %823 = vmax.xlane.f32.xlu0 %v818
        %v824 = vpop.xlane.xlu0 %823
        %v825 = vsub.f32 %v813, %v822
        %v826 = vsub.f32 %v818, %v824
        %v827 = vmul.f32 %v825, 1.442695
        %v828 = vpow.pop %v827
        %v829 = vmul.f32 %v826, 1.442695
        %v830 = vpow.pop %v829
        %831 = vadd.xlane.f32.xlu0 %v828
        %v832 = vpop.xlane.xlu0 %831
        %833 = vadd.xlane.f32.xlu0 %v830
        %v834 = vpop.xlane.xlu0 %833
        %835 = vmatprep.subr.mxu0 0.0
        %836 = vmatpush1.xpose.msra.mxu0 0.0
        %837 = vmatprep.subr.mxu0 0.0
        %838 = vmatpush1.xpose.msra.mxu0 0.0
        %839 = vmatprep.subr.mxu0 0.0
        %840 = vmatpush1.xpose.msra.mxu0 0.0
        %841 = vmatprep.subr.mxu0 0.0
        %842 = vmatpush1.xpose.msra.mxu0 0.0
        %843 = vmatprep.subr.mxu0 0.0
        %844 = vmatpush1.xpose.msra.mxu0 0.0
        %845 = vmatprep.subr.mxu0 0.0
        %846 = vmatpush1.xpose.msra.mxu0 0.0
        %847 = vmatprep.subr.mxu0 0.0
        %848 = vmatpush1.xpose.msra.mxu0 0.0
        %849 = vmatprep.subr.mxu0 0.0
        %850 = vmatpush1.xpose.msra.mxu0 0.0
        %851 = vmatprep.subr.mxu0 0.0
        %852 = vmatpush1.xpose.msra.mxu0 0.0
        %853 = vmatprep.subr.mxu0 0.0
        %854 = vmatpush1.xpose.msra.mxu0 0.0
        %855 = vmatprep.subr.mxu0 0.0
        %856 = vmatpush1.xpose.msra.mxu0 0.0
        %857 = vmatprep.subr.mxu0 0.0
        %858 = vmatpush1.xpose.msra.mxu0 0.0
        %859 = vmatprep.subr.mxu0 0.0
        %860 = vmatpush1.xpose.msra.mxu0 0.0
        %861 = vmatprep.subr.mxu0 0.0
        %862 = vmatpush1.xpose.msra.mxu0 0.0
        %863 = vmatprep.subr.mxu0 0.0
        %864 = vmatpush1.xpose.msra.mxu0 %v830
        %865 = vmatprep.subr.mxu0 0.0
        %866 = vmatpush1.xpose.msra.mxu0 %v828
        %867 = vmatprep.subr.mxu0 0.0
        %868 = vmatpush2.xpose.msra.mxu0 0.0
        %869 = vmatprep.subr.mxu0 0.0
        %870 = vmatpush2.xpose.msra.mxu0 0.0
        %871 = vmatprep.subr.mxu0 0.0
        %872 = vmatpush2.xpose.msra.mxu0 0.0
        %873 = vmatprep.subr.mxu0 0.0
        %874 = vmatpush2.xpose.msra.mxu0 0.0
        %875 = vmatprep.subr.mxu0 0.0
        %876 = vmatpush2.xpose.msra.mxu0 0.0
        %877 = vmatprep.subr.mxu0 0.0
        %878 = vmatpush2.xpose.msra.mxu0 0.0
        %879 = vmatprep.subr.mxu0 0.0
        %880 = vmatpush2.xpose.msra.mxu0 0.0
        %881 = vmatprep.subr.mxu0 0.0
        %882 = vmatpush2.xpose.msra.mxu0 0.0
        %883 = vmatprep.subr.mxu0 0.0
        %884 = vmatpush2.xpose.msra.mxu0 0.0
        %885 = vmatprep.subr.mxu0 0.0
        %886 = vmatpush2.xpose.msra.mxu0 0.0
        %887 = vmatprep.subr.mxu0 0.0
        %888 = vmatpush2.xpose.msra.mxu0 0.0
        %889 = vmatprep.subr.mxu0 0.0
        %890 = vmatpush2.xpose.msra.mxu0 0.0
        %891 = vmatprep.subr.mxu0 0.0
        %892 = vmatpush2.xpose.msra.mxu0 0.0
        %893 = vmatprep.subr.mxu0 0.0
        %894 = vmatpush2.xpose.msra.mxu0 0.0
        %895 = vmatprep.subr.mxu0 0.0
        %896 = vmatpush2.xpose.msra.mxu0 0.0
        %897 = vmatprep.subr.mxu0 0.0
        %898 = vmatpush2.xpose.msra.mxu0 0.0
        %899 = vmatprep.mubr.f32.mxu0 0.0
        %900 = vmatmul.mubr.f32.gmra.mxu0 %v706
        %v901 = vpop.f32.mrf.mxu0
        %v902 = vadd.f32 0.0, %v901
        %v903 = vpop.f32.mrf.mxu0
        %904 = vdwg.mxu0
        %v905 = vrcp.pop %v832
        %v906 = vmul.f32 1.0, %v905
        %v907 = vrcp.pop %v834
        %v908 = vmul.f32 1.0, %v907
        %909 = vxpose.xlu0.b32.start [1/16] %v906, 128
        %910 = vxpose.xlu0.b32.cont [2/16] %v908, 128
        %911 = vxpose.xlu0.b32.cont [3/16] 0.0, 128
        %912 = vxpose.xlu0.b32.cont [4/16] 0.0, 128
        %913 = vxpose.xlu0.b32.cont [5/16] 0.0, 128
        %914 = vxpose.xlu0.b32.cont [6/16] 0.0, 128
        %915 = vxpose.xlu0.b32.cont [7/16] 0.0, 128
        %916 = vxpose.xlu0.b32.cont [8/16] 0.0, 128
        %917 = vxpose.xlu0.b32.cont [9/16] 0.0, 128
        %918 = vxpose.xlu0.b32.cont [10/16] 0.0, 128
        %919 = vxpose.xlu0.b32.cont [11/16] 0.0, 128
        %920 = vxpose.xlu0.b32.cont [12/16] 0.0, 128
        %921 = vxpose.xlu0.b32.cont [13/16] 0.0, 128
        %922 = vxpose.xlu0.b32.cont [14/16] 0.0, 128
        %923 = vxpose.xlu0.b32.cont [15/16] 0.0, 128
        %924 = vxpose.xlu0.b32.end [16/16] 0.0, 128
        %v925 = vpop.trf.xlu0
        %v926 = vpop.trf.xlu0
        %v927 = vpop.trf.xlu0
        %v928 = vpop.trf.xlu0
        %v929 = vpop.trf.xlu0
        %v930 = vpop.trf.xlu0
        %v931 = vpop.trf.xlu0
        %v932 = vpop.trf.xlu0
        %v933 = vpop.trf.xlu0
        %v934 = vpop.trf.xlu0
        %v935 = vpop.trf.xlu0
        %v936 = vpop.trf.xlu0
        %v937 = vpop.trf.xlu0
        %v938 = vpop.trf.xlu0
        %v939 = vpop.trf.xlu0
        %v940 = vpop.trf.xlu0
        %v941 = vlaneseq
        %v942 = vshrl.u32 %v941, 7
        %v943 = vsub.s32 0, %v942
        %v944 = vrot.slane %v925, %v943
        %v945 = vmul.f32 %v902, %v944
        %vm946 = vcmask 130048
        %947 = vst.msk [vmem:[#allocation4] sm:$0xff] %vm946, %v945
        %v948 = vld [vmem:[#allocation2 + $0x8] sm:$0xff]
        %v949 = vld [vmem:[#allocation3 + $0x8] sm:$0xff]
        %950 = vxpose.xlu0.b32.start [1/16] %v688, 128
        %951 = vxpose.xlu0.b32.cont [2/16] 0.0, 128
        %952 = vxpose.xlu0.b32.cont [3/16] 0.0, 128
        %953 = vxpose.xlu0.b32.cont [4/16] 0.0, 128
        %954 = vxpose.xlu0.b32.cont [5/16] 0.0, 128
        %955 = vxpose.xlu0.b32.cont [6/16] 0.0, 128
        %956 = vxpose.xlu0.b32.cont [7/16] 0.0, 128
        %957 = vxpose.xlu0.b32.cont [8/16] 0.0, 128
        %958 = vxpose.xlu0.b32.cont [9/16] 0.0, 128
        %959 = vxpose.xlu0.b32.cont [10/16] 0.0, 128
        %960 = vxpose.xlu0.b32.cont [11/16] 0.0, 128
        %961 = vxpose.xlu0.b32.cont [12/16] 0.0, 128
        %962 = vxpose.xlu0.b32.cont [13/16] 0.0, 128
        %963 = vxpose.xlu0.b32.cont [14/16] 0.0, 128
        %964 = vxpose.xlu0.b32.cont [15/16] 0.0, 128
        %965 = vxpose.xlu0.b32.end [16/16] 0.0, 128
        %v966 = vpop.trf.xlu0
        %v967 = vpop.trf.xlu0
        %v968 = vpop.trf.xlu0
        %v969 = vpop.trf.xlu0
        %v970 = vpop.trf.xlu0
        %v971 = vpop.trf.xlu0
        %v972 = vpop.trf.xlu0
        %v973 = vpop.trf.xlu0
        %v974 = vpop.trf.xlu0
        %v975 = vpop.trf.xlu0
        %v976 = vpop.trf.xlu0
        %v977 = vpop.trf.xlu0
        %v978 = vpop.trf.xlu0
        %v979 = vpop.trf.xlu0
        %v980 = vpop.trf.xlu0
        %v981 = vpop.trf.xlu0
        %v983 = vsel %vm739, %v966, 0
        %v986 = vsel %vm739, %v967, 0
        %988 = vmatprep.subr.mxu0 0.0
        %989 = vmatpush1.msra.mxu0 0.0
        %990 = vmatprep.subr.mxu0 0.0
        %991 = vmatpush1.msra.mxu0 0.0
        %992 = vmatprep.subr.mxu0 0.0
        %993 = vmatpush1.msra.mxu0 0.0
        %994 = vmatprep.subr.mxu0 0.0
        %995 = vmatpush1.msra.mxu0 0.0
        %996 = vmatprep.subr.mxu0 0.0
        %997 = vmatpush1.msra.mxu0 0.0
        %998 = vmatprep.subr.mxu0 0.0
        %999 = vmatpush1.msra.mxu0 0.0
        %1000 = vmatprep.subr.mxu0 0.0
        %1001 = vmatpush1.msra.mxu0 0.0
        %1002 = vmatprep.subr.mxu0 0.0
        %1003 = vmatpush1.msra.mxu0 0.0
        %1004 = vmatprep.subr.mxu0 0.0
        %1005 = vmatpush1.msra.mxu0 0.0
        %1006 = vmatprep.subr.mxu0 0.0
        %1007 = vmatpush1.msra.mxu0 0.0
        %1008 = vmatprep.subr.mxu0 0.0
        %1009 = vmatpush1.msra.mxu0 0.0
        %1010 = vmatprep.subr.mxu0 0.0
        %1011 = vmatpush1.msra.mxu0 0.0
        %1012 = vmatprep.subr.mxu0 0.0
        %1013 = vmatpush1.msra.mxu0 0.0
        %1014 = vmatprep.subr.mxu0 0.0
        %1015 = vmatpush1.msra.mxu0 0.0
        %1016 = vmatprep.subr.mxu0 0.0
        %1017 = vmatpush1.msra.mxu0 0.0
        %1018 = vmatprep.subr.mxu0 0.0
        %1019 = vmatpush1.msra.mxu0 %v948
        %1020 = vmatprep.subr.mxu0 0.0
        %1021 = vmatpush2.msra.mxu0 0.0
        %1022 = vmatprep.subr.mxu0 0.0
        %1023 = vmatpush2.msra.mxu0 0.0
        %1024 = vmatprep.subr.mxu0 0.0
        %1025 = vmatpush2.msra.mxu0 0.0
        %1026 = vmatprep.subr.mxu0 0.0
        %1027 = vmatpush2.msra.mxu0 0.0
        %1028 = vmatprep.subr.mxu0 0.0
        %1029 = vmatpush2.msra.mxu0 0.0
        %1030 = vmatprep.subr.mxu0 0.0
        %1031 = vmatpush2.msra.mxu0 0.0
        %1032 = vmatprep.subr.mxu0 0.0
        %1033 = vmatpush2.msra.mxu0 0.0
        %1034 = vmatprep.subr.mxu0 0.0
        %1035 = vmatpush2.msra.mxu0 0.0
        %1036 = vmatprep.subr.mxu0 0.0
        %1037 = vmatpush2.msra.mxu0 0.0
        %1038 = vmatprep.subr.mxu0 0.0
        %1039 = vmatpush2.msra.mxu0 0.0
        %1040 = vmatprep.subr.mxu0 0.0
        %1041 = vmatpush2.msra.mxu0 0.0
        %1042 = vmatprep.subr.mxu0 0.0
        %1043 = vmatpush2.msra.mxu0 0.0
        %1044 = vmatprep.subr.mxu0 0.0
        %1045 = vmatpush2.msra.mxu0 0.0
        %1046 = vmatprep.subr.mxu0 0.0
        %1047 = vmatpush2.msra.mxu0 0.0
        %1048 = vmatprep.subr.mxu0 0.0
        %1049 = vmatpush2.msra.mxu0 0.0
        %1050 = vmatprep.subr.mxu0 0.0
        %1051 = vmatpush2.msra.mxu0 0.0
        %1052 = vmatprep.mubr.f32.mxu0 0.0
        %1053 = vmatmul.mubr.f32.gmra.mxu0 %v983
        %v1054 = vpop.f32.mrf.mxu0
        %v1055 = vadd.f32 %v704, %v1054
        %v1056 = vpop.f32.mrf.mxu0
        %1057 = vmatprep.mubr.f32.mxu0 0.0
        %1058 = vmatmul.mubr.f32.gmra.mxu0 %v986
        %v1059 = vpop.f32.mrf.mxu0
        %v1060 = vadd.f32 %v704, %v1059
        %v1061 = vpop.f32.mrf.mxu0
        %1062 = vdwg.mxu0
        %1063 = vmax.xlane.f32.xlu0 %v1055
        %v1064 = vpop.xlane.xlu0 %1063
        %1065 = vmax.xlane.f32.xlu0 %v1060
        %v1066 = vpop.xlane.xlu0 %1065
        %v1067 = vsub.f32 %v1055, %v1064
        %v1068 = vsub.f32 %v1060, %v1066
        %v1069 = vmul.f32 %v1067, 1.442695
        %v1070 = vpow.pop %v1069
        %v1071 = vmul.f32 %v1068, 1.442695
        %v1072 = vpow.pop %v1071
        %1073 = vadd.xlane.f32.xlu0 %v1070
        %v1074 = vpop.xlane.xlu0 %1073
        %1075 = vadd.xlane.f32.xlu0 %v1072
        %v1076 = vpop.xlane.xlu0 %1075
        %1077 = vmatprep.subr.mxu0 0.0
        %1078 = vmatpush1.xpose.msra.mxu0 0.0
        %1079 = vmatprep.subr.mxu0 0.0
        %1080 = vmatpush1.xpose.msra.mxu0 0.0
        %1081 = vmatprep.subr.mxu0 0.0
        %1082 = vmatpush1.xpose.msra.mxu0 0.0
        %1083 = vmatprep.subr.mxu0 0.0
        %1084 = vmatpush1.xpose.msra.mxu0 0.0
        %1085 = vmatprep.subr.mxu0 0.0
        %1086 = vmatpush1.xpose.msra.mxu0 0.0
        %1087 = vmatprep.subr.mxu0 0.0
        %1088 = vmatpush1.xpose.msra.mxu0 0.0
        %1089 = vmatprep.subr.mxu0 0.0
        %1090 = vmatpush1.xpose.msra.mxu0 0.0
        %1091 = vmatprep.subr.mxu0 0.0
        %1092 = vmatpush1.xpose.msra.mxu0 0.0
        %1093 = vmatprep.subr.mxu0 0.0
        %1094 = vmatpush1.xpose.msra.mxu0 0.0
        %1095 = vmatprep.subr.mxu0 0.0
        %1096 = vmatpush1.xpose.msra.mxu0 0.0
        %1097 = vmatprep.subr.mxu0 0.0
        %1098 = vmatpush1.xpose.msra.mxu0 0.0
        %1099 = vmatprep.subr.mxu0 0.0
        %1100 = vmatpush1.xpose.msra.mxu0 0.0
        %1101 = vmatprep.subr.mxu0 0.0
        %1102 = vmatpush1.xpose.msra.mxu0 0.0
        %1103 = vmatprep.subr.mxu0 0.0
        %1104 = vmatpush1.xpose.msra.mxu0 0.0
        %1105 = vmatprep.subr.mxu0 0.0
        %1106 = vmatpush1.xpose.msra.mxu0 %v1072
        %1107 = vmatprep.subr.mxu0 0.0
        %1108 = vmatpush1.xpose.msra.mxu0 %v1070
        %1109 = vmatprep.subr.mxu0 0.0
        %1110 = vmatpush2.xpose.msra.mxu0 0.0
        %1111 = vmatprep.subr.mxu0 0.0
        %1112 = vmatpush2.xpose.msra.mxu0 0.0
        %1113 = vmatprep.subr.mxu0 0.0
        %1114 = vmatpush2.xpose.msra.mxu0 0.0
        %1115 = vmatprep.subr.mxu0 0.0
        %1116 = vmatpush2.xpose.msra.mxu0 0.0
        %1117 = vmatprep.subr.mxu0 0.0
        %1118 = vmatpush2.xpose.msra.mxu0 0.0
        %1119 = vmatprep.subr.mxu0 0.0
        %1120 = vmatpush2.xpose.msra.mxu0 0.0
        %1121 = vmatprep.subr.mxu0 0.0
        %1122 = vmatpush2.xpose.msra.mxu0 0.0
        %1123 = vmatprep.subr.mxu0 0.0
        %1124 = vmatpush2.xpose.msra.mxu0 0.0
        %1125 = vmatprep.subr.mxu0 0.0
        %1126 = vmatpush2.xpose.msra.mxu0 0.0
        %1127 = vmatprep.subr.mxu0 0.0
        %1128 = vmatpush2.xpose.msra.mxu0 0.0
        %1129 = vmatprep.subr.mxu0 0.0
        %1130 = vmatpush2.xpose.msra.mxu0 0.0
        %1131 = vmatprep.subr.mxu0 0.0
        %1132 = vmatpush2.xpose.msra.mxu0 0.0
        %1133 = vmatprep.subr.mxu0 0.0
        %1134 = vmatpush2.xpose.msra.mxu0 0.0
        %1135 = vmatprep.subr.mxu0 0.0
        %1136 = vmatpush2.xpose.msra.mxu0 0.0
        %1137 = vmatprep.subr.mxu0 0.0
        %1138 = vmatpush2.xpose.msra.mxu0 0.0
        %1139 = vmatprep.subr.mxu0 0.0
        %1140 = vmatpush2.xpose.msra.mxu0 0.0
        %1141 = vmatprep.mubr.f32.mxu0 0.0
        %1142 = vmatmul.mubr.f32.gmra.mxu0 %v949
        %v1143 = vpop.f32.mrf.mxu0
        %v1144 = vadd.f32 0.0, %v1143
        %v1145 = vpop.f32.mrf.mxu0
        %1146 = vdwg.mxu0
        %v1147 = vrcp.pop %v1074
        %v1148 = vmul.f32 1.0, %v1147
        %v1149 = vrcp.pop %v1076
        %v1150 = vmul.f32 1.0, %v1149
        %1151 = vxpose.xlu0.b32.start [1/16] %v1148, 128
        %1152 = vxpose.xlu0.b32.cont [2/16] %v1150, 128
        %1153 = vxpose.xlu0.b32.cont [3/16] 0.0, 128
        %1154 = vxpose.xlu0.b32.cont [4/16] 0.0, 128
        %1155 = vxpose.xlu0.b32.cont [5/16] 0.0, 128
        %1156 = vxpose.xlu0.b32.cont [6/16] 0.0, 128
        %1157 = vxpose.xlu0.b32.cont [7/16] 0.0, 128
        %1158 = vxpose.xlu0.b32.cont [8/16] 0.0, 128
        %1159 = vxpose.xlu0.b32.cont [9/16] 0.0, 128
        %1160 = vxpose.xlu0.b32.cont [10/16] 0.0, 128
        %1161 = vxpose.xlu0.b32.cont [11/16] 0.0, 128
        %1162 = vxpose.xlu0.b32.cont [12/16] 0.0, 128
        %1163 = vxpose.xlu0.b32.cont [13/16] 0.0, 128
        %1164 = vxpose.xlu0.b32.cont [14/16] 0.0, 128
        %1165 = vxpose.xlu0.b32.cont [15/16] 0.0, 128
        %1166 = vxpose.xlu0.b32.end [16/16] 0.0, 128
        %v1167 = vpop.trf.xlu0
        %v1168 = vpop.trf.xlu0
        %v1169 = vpop.trf.xlu0
        %v1170 = vpop.trf.xlu0
        %v1171 = vpop.trf.xlu0
        %v1172 = vpop.trf.xlu0
        %v1173 = vpop.trf.xlu0
        %v1174 = vpop.trf.xlu0
        %v1175 = vpop.trf.xlu0
        %v1176 = vpop.trf.xlu0
        %v1177 = vpop.trf.xlu0
        %v1178 = vpop.trf.xlu0
        %v1179 = vpop.trf.xlu0
        %v1180 = vpop.trf.xlu0
        %v1181 = vpop.trf.xlu0
        %v1182 = vpop.trf.xlu0
        %v1183 = vlaneseq
        %v1184 = vshrl.u32 %v1183, 7
        %v1185 = vsub.s32 0, %v1184
        %v1186 = vrot.slane %v1167, %v1185
        %v1187 = vmul.f32 %v1144, %v1186
        %1188 = vst.msk [vmem:[#allocation4 + $0x8] sm:$0xff] %vm946, %v1187
        %v1189 = vld [vmem:[#allocation2 + $0x10] sm:$0xff]
        %v1190 = vld [vmem:[#allocation3 + $0x10] sm:$0xff]
        %1191 = vxpose.xlu0.b32.start [1/16] %v693, 128
        %1192 = vxpose.xlu0.b32.cont [2/16] 0.0, 128
        %1193 = vxpose.xlu0.b32.cont [3/16] 0.0, 128
        %1194 = vxpose.xlu0.b32.cont [4/16] 0.0, 128
        %1195 = vxpose.xlu0.b32.cont [5/16] 0.0, 128
        %1196 = vxpose.xlu0.b32.cont [6/16] 0.0, 128
        %1197 = vxpose.xlu0.b32.cont [7/16] 0.0, 128
        %1198 = vxpose.xlu0.b32.cont [8/16] 0.0, 128
        %1199 = vxpose.xlu0.b32.cont [9/16] 0.0, 128
        %1200 = vxpose.xlu0.b32.cont [10/16] 0.0, 128
        %1201 = vxpose.xlu0.b32.cont [11/16] 0.0, 128
        %1202 = vxpose.xlu0.b32.cont [12/16] 0.0, 128
        %1203 = vxpose.xlu0.b32.cont [13/16] 0.0, 128
        %1204 = vxpose.xlu0.b32.cont [14/16] 0.0, 128
        %1205 = vxpose.xlu0.b32.cont [15/16] 0.0, 128
        %1206 = vxpose.xlu0.b32.end [16/16] 0.0, 128
        %v1207 = vpop.trf.xlu0
        %v1208 = vpop.trf.xlu0
        %v1209 = vpop.trf.xlu0
        %v1210 = vpop.trf.xlu0
        %v1211 = vpop.trf.xlu0
        %v1212 = vpop.trf.xlu0
        %v1213 = vpop.trf.xlu0
        %v1214 = vpop.trf.xlu0
        %v1215 = vpop.trf.xlu0
        %v1216 = vpop.trf.xlu0
        %v1217 = vpop.trf.xlu0
        %v1218 = vpop.trf.xlu0
        %v1219 = vpop.trf.xlu0
        %v1220 = vpop.trf.xlu0
        %v1221 = vpop.trf.xlu0
        %v1222 = vpop.trf.xlu0
        %v1224 = vsel %vm739, %v1207, 0
        %v1227 = vsel %vm739, %v1208, 0
        %1229 = vmatprep.subr.mxu0 0.0
        %1230 = vmatpush1.msra.mxu0 0.0
        %1231 = vmatprep.subr.mxu0 0.0
        %1232 = vmatpush1.msra.mxu0 0.0
        %1233 = vmatprep.subr.mxu0 0.0
        %1234 = vmatpush1.msra.mxu0 0.0
        %1235 = vmatprep.subr.mxu0 0.0
        %1236 = vmatpush1.msra.mxu0 0.0
        %1237 = vmatprep.subr.mxu0 0.0
        %1238 = vmatpush1.msra.mxu0 0.0
        %1239 = vmatprep.subr.mxu0 0.0
        %1240 = vmatpush1.msra.mxu0 0.0
        %1241 = vmatprep.subr.mxu0 0.0
        %1242 = vmatpush1.msra.mxu0 0.0
        %1243 = vmatprep.subr.mxu0 0.0
        %1244 = vmatpush1.msra.mxu0 0.0
        %1245 = vmatprep.subr.mxu0 0.0
        %1246 = vmatpush1.msra.mxu0 0.0
        %1247 = vmatprep.subr.mxu0 0.0
        %1248 = vmatpush1.msra.mxu0 0.0
        %1249 = vmatprep.subr.mxu0 0.0
        %1250 = vmatpush1.msra.mxu0 0.0
        %1251 = vmatprep.subr.mxu0 0.0
        %1252 = vmatpush1.msra.mxu0 0.0
        %1253 = vmatprep.subr.mxu0 0.0
        %1254 = vmatpush1.msra.mxu0 0.0
        %1255 = vmatprep.subr.mxu0 0.0
        %1256 = vmatpush1.msra.mxu0 0.0
        %1257 = vmatprep.subr.mxu0 0.0
        %1258 = vmatpush1.msra.mxu0 0.0
        %1259 = vmatprep.subr.mxu0 0.0
        %1260 = vmatpush1.msra.mxu0 %v1189
        %1261 = vmatprep.subr.mxu0 0.0
        %1262 = vmatpush2.msra.mxu0 0.0
        %1263 = vmatprep.subr.mxu0 0.0
        %1264 = vmatpush2.msra.mxu0 0.0
        %1265 = vmatprep.subr.mxu0 0.0
        %1266 = vmatpush2.msra.mxu0 0.0
        %1267 = vmatprep.subr.mxu0 0.0
        %1268 = vmatpush2.msra.mxu0 0.0
        %1269 = vmatprep.subr.mxu0 0.0
        %1270 = vmatpush2.msra.mxu0 0.0
        %1271 = vmatprep.subr.mxu0 0.0
        %1272 = vmatpush2.msra.mxu0 0.0
        %1273 = vmatprep.subr.mxu0 0.0
        %1274 = vmatpush2.msra.mxu0 0.0
        %1275 = vmatprep.subr.mxu0 0.0
        %1276 = vmatpush2.msra.mxu0 0.0
        %1277 = vmatprep.subr.mxu0 0.0
        %1278 = vmatpush2.msra.mxu0 0.0
        %1279 = vmatprep.subr.mxu0 0.0
        %1280 = vmatpush2.msra.mxu0 0.0
        %1281 = vmatprep.subr.mxu0 0.0
        %1282 = vmatpush2.msra.mxu0 0.0
        %1283 = vmatprep.subr.mxu0 0.0
        %1284 = vmatpush2.msra.mxu0 0.0
        %1285 = vmatprep.subr.mxu0 0.0
        %1286 = vmatpush2.msra.mxu0 0.0
        %1287 = vmatprep.subr.mxu0 0.0
        %1288 = vmatpush2.msra.mxu0 0.0
        %1289 = vmatprep.subr.mxu0 0.0
        %1290 = vmatpush2.msra.mxu0 0.0
        %1291 = vmatprep.subr.mxu0 0.0
        %1292 = vmatpush2.msra.mxu0 0.0
        %1293 = vmatprep.mubr.f32.mxu0 0.0
        %1294 = vmatmul.mubr.f32.gmra.mxu0 %v1224
        %v1295 = vpop.f32.mrf.mxu0
        %v1296 = vadd.f32 %v704, %v1295
        %v1297 = vpop.f32.mrf.mxu0
        %1298 = vmatprep.mubr.f32.mxu0 0.0
        %1299 = vmatmul.mubr.f32.gmra.mxu0 %v1227
        %v1300 = vpop.f32.mrf.mxu0
        %v1301 = vadd.f32 %v704, %v1300
        %v1302 = vpop.f32.mrf.mxu0
        %1303 = vdwg.mxu0
        %1304 = vmax.xlane.f32.xlu0 %v1296
        %v1305 = vpop.xlane.xlu0 %1304
        %1306 = vmax.xlane.f32.xlu0 %v1301
        %v1307 = vpop.xlane.xlu0 %1306
        %v1308 = vsub.f32 %v1296, %v1305
        %v1309 = vsub.f32 %v1301, %v1307
        %v1310 = vmul.f32 %v1308, 1.442695
        %v1311 = vpow.pop %v1310
        %v1312 = vmul.f32 %v1309, 1.442695
        %v1313 = vpow.pop %v1312
        %1314 = vadd.xlane.f32.xlu0 %v1311
        %v1315 = vpop.xlane.xlu0 %1314
        %1316 = vadd.xlane.f32.xlu0 %v1313
        %v1317 = vpop.xlane.xlu0 %1316
        %1318 = vmatprep.subr.mxu0 0.0
        %1319 = vmatpush1.xpose.msra.mxu0 0.0
        %1320 = vmatprep.subr.mxu0 0.0
        %1321 = vmatpush1.xpose.msra.mxu0 0.0
        %1322 = vmatprep.subr.mxu0 0.0
        %1323 = vmatpush1.xpose.msra.mxu0 0.0
        %1324 = vmatprep.subr.mxu0 0.0
        %1325 = vmatpush1.xpose.msra.mxu0 0.0
        %1326 = vmatprep.subr.mxu0 0.0
        %1327 = vmatpush1.xpose.msra.mxu0 0.0
        %1328 = vmatprep.subr.mxu0 0.0
        %1329 = vmatpush1.xpose.msra.mxu0 0.0
        %1330 = vmatprep.subr.mxu0 0.0
        %1331 = vmatpush1.xpose.msra.mxu0 0.0
        %1332 = vmatprep.subr.mxu0 0.0
        %1333 = vmatpush1.xpose.msra.mxu0 0.0
        %1334 = vmatprep.subr.mxu0 0.0
        %1335 = vmatpush1.xpose.msra.mxu0 0.0
        %1336 = vmatprep.subr.mxu0 0.0
        %1337 = vmatpush1.xpose.msra.mxu0 0.0
        %1338 = vmatprep.subr.mxu0 0.0
        %1339 = vmatpush1.xpose.msra.mxu0 0.0
        %1340 = vmatprep.subr.mxu0 0.0
        %1341 = vmatpush1.xpose.msra.mxu0 0.0
        %1342 = vmatprep.subr.mxu0 0.0
        %1343 = vmatpush1.xpose.msra.mxu0 0.0
        %1344 = vmatprep.subr.mxu0 0.0
        %1345 = vmatpush1.xpose.msra.mxu0 0.0
        %1346 = vmatprep.subr.mxu0 0.0
        %1347 = vmatpush1.xpose.msra.mxu0 %v1313
        %1348 = vmatprep.subr.mxu0 0.0
        %1349 = vmatpush1.xpose.msra.mxu0 %v1311
        %1350 = vmatprep.subr.mxu0 0.0
        %1351 = vmatpush2.xpose.msra.mxu0 0.0
        %1352 = vmatprep.subr.mxu0 0.0
        %1353 = vmatpush2.xpose.msra.mxu0 0.0
        %1354 = vmatprep.subr.mxu0 0.0
        %1355 = vmatpush2.xpose.msra.mxu0 0.0
        %1356 = vmatprep.subr.mxu0 0.0
        %1357 = vmatpush2.xpose.msra.mxu0 0.0
        %1358 = vmatprep.subr.mxu0 0.0
        %1359 = vmatpush2.xpose.msra.mxu0 0.0
        %1360 = vmatprep.subr.mxu0 0.0
        %1361 = vmatpush2.xpose.msra.mxu0 0.0
        %1362 = vmatprep.subr.mxu0 0.0
        %1363 = vmatpush2.xpose.msra.mxu0 0.0
        %1364 = vmatprep.subr.mxu0 0.0
        %1365 = vmatpush2.xpose.msra.mxu0 0.0
        %1366 = vmatprep.subr.mxu0 0.0
        %1367 = vmatpush2.xpose.msra.mxu0 0.0
        %1368 = vmatprep.subr.mxu0 0.0
        %1369 = vmatpush2.xpose.msra.mxu0 0.0
        %1370 = vmatprep.subr.mxu0 0.0
        %1371 = vmatpush2.xpose.msra.mxu0 0.0
        %1372 = vmatprep.subr.mxu0 0.0
        %1373 = vmatpush2.xpose.msra.mxu0 0.0
        %1374 = vmatprep.subr.mxu0 0.0
        %1375 = vmatpush2.xpose.msra.mxu0 0.0
        %1376 = vmatprep.subr.mxu0 0.0
        %1377 = vmatpush2.xpose.msra.mxu0 0.0
        %1378 = vmatprep.subr.mxu0 0.0
        %1379 = vmatpush2.xpose.msra.mxu0 0.0
        %1380 = vmatprep.subr.mxu0 0.0
        %1381 = vmatpush2.xpose.msra.mxu0 0.0
        %1382 = vmatprep.mubr.f32.mxu0 0.0
        %1383 = vmatmul.mubr.f32.gmra.mxu0 %v1190
        %v1384 = vpop.f32.mrf.mxu0
        %v1385 = vadd.f32 0.0, %v1384
        %v1386 = vpop.f32.mrf.mxu0
        %1387 = vdwg.mxu0
        %v1388 = vrcp.pop %v1315
        %v1389 = vmul.f32 1.0, %v1388
        %v1390 = vrcp.pop %v1317
        %v1391 = vmul.f32 1.0, %v1390
        %1392 = vxpose.xlu0.b32.start [1/16] %v1389, 128
        %1393 = vxpose.xlu0.b32.cont [2/16] %v1391, 128
        %1394 = vxpose.xlu0.b32.cont [3/16] 0.0, 128
        %1395 = vxpose.xlu0.b32.cont [4/16] 0.0, 128
        %1396 = vxpose.xlu0.b32.cont [5/16] 0.0, 128
        %1397 = vxpose.xlu0.b32.cont [6/16] 0.0, 128
        %1398 = vxpose.xlu0.b32.cont [7/16] 0.0, 128
        %1399 = vxpose.xlu0.b32.cont [8/16] 0.0, 128
        %1400 = vxpose.xlu0.b32.cont [9/16] 0.0, 128
        %1401 = vxpose.xlu0.b32.cont [10/16] 0.0, 128
        %1402 = vxpose.xlu0.b32.cont [11/16] 0.0, 128
        %1403 = vxpose.xlu0.b32.cont [12/16] 0.0, 128
        %1404 = vxpose.xlu0.b32.cont [13/16] 0.0, 128
        %1405 = vxpose.xlu0.b32.cont [14/16] 0.0, 128
        %1406 = vxpose.xlu0.b32.cont [15/16] 0.0, 128
        %1407 = vxpose.xlu0.b32.end [16/16] 0.0, 128
        %v1408 = vpop.trf.xlu0
        %v1409 = vpop.trf.xlu0
        %v1410 = vpop.trf.xlu0
        %v1411 = vpop.trf.xlu0
        %v1412 = vpop.trf.xlu0
        %v1413 = vpop.trf.xlu0
        %v1414 = vpop.trf.xlu0
        %v1415 = vpop.trf.xlu0
        %v1416 = vpop.trf.xlu0
        %v1417 = vpop.trf.xlu0
        %v1418 = vpop.trf.xlu0
        %v1419 = vpop.trf.xlu0
        %v1420 = vpop.trf.xlu0
        %v1421 = vpop.trf.xlu0
        %v1422 = vpop.trf.xlu0
        %v1423 = vpop.trf.xlu0
        %v1424 = vlaneseq
        %v1425 = vshrl.u32 %v1424, 7
        %v1426 = vsub.s32 0, %v1425
        %v1427 = vrot.slane %v1408, %v1426
        %v1428 = vmul.f32 %v1385, %v1427
        %1429 = vst.msk [vmem:[#allocation4 + $0x10] sm:$0xff] %vm946, %v1428
        %v1430 = vld [vmem:[#allocation2 + $0x18] sm:$0xff]
        %v1431 = vld [vmem:[#allocation3 + $0x18] sm:$0xff]
        %1432 = vxpose.xlu0.b32.start [1/16] %v698, 128
        %1433 = vxpose.xlu0.b32.cont [2/16] 0.0, 128
        %1434 = vxpose.xlu0.b32.cont [3/16] 0.0, 128
        %1435 = vxpose.xlu0.b32.cont [4/16] 0.0, 128
        %1436 = vxpose.xlu0.b32.cont [5/16] 0.0, 128
        %1437 = vxpose.xlu0.b32.cont [6/16] 0.0, 128
        %1438 = vxpose.xlu0.b32.cont [7/16] 0.0, 128
        %1439 = vxpose.xlu0.b32.cont [8/16] 0.0, 128
        %1440 = vxpose.xlu0.b32.cont [9/16] 0.0, 128
        %1441 = vxpose.xlu0.b32.cont [10/16] 0.0, 128
        %1442 = vxpose.xlu0.b32.cont [11/16] 0.0, 128
        %1443 = vxpose.xlu0.b32.cont [12/16] 0.0, 128
        %1444 = vxpose.xlu0.b32.cont [13/16] 0.0, 128
        %1445 = vxpose.xlu0.b32.cont [14/16] 0.0, 128
        %1446 = vxpose.xlu0.b32.cont [15/16] 0.0, 128
        %1447 = vxpose.xlu0.b32.end [16/16] 0.0, 128
        %v1448 = vpop.trf.xlu0
        %v1449 = vpop.trf.xlu0
        %v1450 = vpop.trf.xlu0
        %v1451 = vpop.trf.xlu0
        %v1452 = vpop.trf.xlu0
        %v1453 = vpop.trf.xlu0
        %v1454 = vpop.trf.xlu0
        %v1455 = vpop.trf.xlu0
        %v1456 = vpop.trf.xlu0
        %v1457 = vpop.trf.xlu0
        %v1458 = vpop.trf.xlu0
        %v1459 = vpop.trf.xlu0
        %v1460 = vpop.trf.xlu0
        %v1461 = vpop.trf.xlu0
        %v1462 = vpop.trf.xlu0
        %v1463 = vpop.trf.xlu0
        %v1465 = vsel %vm739, %v1448, 0
        %v1468 = vsel %vm739, %v1449, 0
        %1470 = vmatprep.subr.mxu0 0.0
        %1471 = vmatpush1.msra.mxu0 0.0
        %1472 = vmatprep.subr.mxu0 0.0
        %1473 = vmatpush1.msra.mxu0 0.0
        %1474 = vmatprep.subr.mxu0 0.0
        %1475 = vmatpush1.msra.mxu0 0.0
        %1476 = vmatprep.subr.mxu0 0.0
        %1477 = vmatpush1.msra.mxu0 0.0
        %1478 = vmatprep.subr.mxu0 0.0
        %1479 = vmatpush1.msra.mxu0 0.0
        %1480 = vmatprep.subr.mxu0 0.0
        %1481 = vmatpush1.msra.mxu0 0.0
        %1482 = vmatprep.subr.mxu0 0.0
        %1483 = vmatpush1.msra.mxu0 0.0
        %1484 = vmatprep.subr.mxu0 0.0
        %1485 = vmatpush1.msra.mxu0 0.0
        %1486 = vmatprep.subr.mxu0 0.0
        %1487 = vmatpush1.msra.mxu0 0.0
        %1488 = vmatprep.subr.mxu0 0.0
        %1489 = vmatpush1.msra.mxu0 0.0
        %1490 = vmatprep.subr.mxu0 0.0
        %1491 = vmatpush1.msra.mxu0 0.0
        %1492 = vmatprep.subr.mxu0 0.0
        %1493 = vmatpush1.msra.mxu0 0.0
        %1494 = vmatprep.subr.mxu0 0.0
        %1495 = vmatpush1.msra.mxu0 0.0
        %1496 = vmatprep.subr.mxu0 0.0
        %1497 = vmatpush1.msra.mxu0 0.0
        %1498 = vmatprep.subr.mxu0 0.0
        %1499 = vmatpush1.msra.mxu0 0.0
        %1500 = vmatprep.subr.mxu0 0.0
        %1501 = vmatpush1.msra.mxu0 %v1430
        %1502 = vmatprep.subr.mxu0 0.0
        %1503 = vmatpush2.msra.mxu0 0.0
        %1504 = vmatprep.subr.mxu0 0.0
        %1505 = vmatpush2.msra.mxu0 0.0
        %1506 = vmatprep.subr.mxu0 0.0
        %1507 = vmatpush2.msra.mxu0 0.0
        %1508 = vmatprep.subr.mxu0 0.0
        %1509 = vmatpush2.msra.mxu0 0.0
        %1510 = vmatprep.subr.mxu0 0.0
        %1511 = vmatpush2.msra.mxu0 0.0
        %1512 = vmatprep.subr.mxu0 0.0
        %1513 = vmatpush2.msra.mxu0 0.0
        %1514 = vmatprep.subr.mxu0 0.0
        %1515 = vmatpush2.msra.mxu0 0.0
        %1516 = vmatprep.subr.mxu0 0.0
        %1517 = vmatpush2.msra.mxu0 0.0
        %1518 = vmatprep.subr.mxu0 0.0
        %1519 = vmatpush2.msra.mxu0 0.0
        %1520 = vmatprep.subr.mxu0 0.0
        %1521 = vmatpush2.msra.mxu0 0.0
        %1522 = vmatprep.subr.mxu0 0.0
        %1523 = vmatpush2.msra.mxu0 0.0
        %1524 = vmatprep.subr.mxu0 0.0
        %1525 = vmatpush2.msra.mxu0 0.0
        %1526 = vmatprep.subr.mxu0 0.0
        %1527 = vmatpush2.msra.mxu0 0.0
        %1528 = vmatprep.subr.mxu0 0.0
        %1529 = vmatpush2.msra.mxu0 0.0
        %1530 = vmatprep.subr.mxu0 0.0
        %1531 = vmatpush2.msra.mxu0 0.0
        %1532 = vmatprep.subr.mxu0 0.0
        %1533 = vmatpush2.msra.mxu0 0.0
        %1534 = vmatprep.mubr.f32.mxu0 0.0
        %1535 = vmatmul.mubr.f32.gmra.mxu0 %v1465
        %v1536 = vpop.f32.mrf.mxu0
        %v1537 = vadd.f32 %v704, %v1536
        %v1538 = vpop.f32.mrf.mxu0
        %1539 = vmatprep.mubr.f32.mxu0 0.0
        %1540 = vmatmul.mubr.f32.gmra.mxu0 %v1468
        %v1541 = vpop.f32.mrf.mxu0
        %v1542 = vadd.f32 %v704, %v1541
        %v1543 = vpop.f32.mrf.mxu0
        %1544 = vdwg.mxu0
        %1545 = vmax.xlane.f32.xlu0 %v1537
        %v1546 = vpop.xlane.xlu0 %1545
        %1547 = vmax.xlane.f32.xlu0 %v1542
        %v1548 = vpop.xlane.xlu0 %1547
        %v1549 = vsub.f32 %v1537, %v1546
        %v1550 = vsub.f32 %v1542, %v1548
        %v1551 = vmul.f32 %v1549, 1.442695
        %v1552 = vpow.pop %v1551
        %v1553 = vmul.f32 %v1550, 1.442695
        %v1554 = vpow.pop %v1553
        %1555 = vadd.xlane.f32.xlu0 %v1552
        %v1556 = vpop.xlane.xlu0 %1555
        %1557 = vadd.xlane.f32.xlu0 %v1554
        %v1558 = vpop.xlane.xlu0 %1557
        %1559 = vmatprep.subr.mxu0 0.0
        %1560 = vmatpush1.xpose.msra.mxu0 0.0
        %1561 = vmatprep.subr.mxu0 0.0
        %1562 = vmatpush1.xpose.msra.mxu0 0.0
        %1563 = vmatprep.subr.mxu0 0.0
        %1564 = vmatpush1.xpose.msra.mxu0 0.0
        %1565 = vmatprep.subr.mxu0 0.0
        %1566 = vmatpush1.xpose.msra.mxu0 0.0
        %1567 = vmatprep.subr.mxu0 0.0
        %1568 = vmatpush1.xpose.msra.mxu0 0.0
        %1569 = vmatprep.subr.mxu0 0.0
        %1570 = vmatpush1.xpose.msra.mxu0 0.0
        %1571 = vmatprep.subr.mxu0 0.0
        %1572 = vmatpush1.xpose.msra.mxu0 0.0
        %1573 = vmatprep.subr.mxu0 0.0
        %1574 = vmatpush1.xpose.msra.mxu0 0.0
        %1575 = vmatprep.subr.mxu0 0.0
        %1576 = vmatpush1.xpose.msra.mxu0 0.0
        %1577 = vmatprep.subr.mxu0 0.0
        %1578 = vmatpush1.xpose.msra.mxu0 0.0
        %1579 = vmatprep.subr.mxu0 0.0
        %1580 = vmatpush1.xpose.msra.mxu0 0.0
        %1581 = vmatprep.subr.mxu0 0.0
        %1582 = vmatpush1.xpose.msra.mxu0 0.0
        %1583 = vmatprep.subr.mxu0 0.0
        %1584 = vmatpush1.xpose.msra.mxu0 0.0
        %1585 = vmatprep.subr.mxu0 0.0
        %1586 = vmatpush1.xpose.msra.mxu0 0.0
        %1587 = vmatprep.subr.mxu0 0.0
        %1588 = vmatpush1.xpose.msra.mxu0 %v1554
        %1589 = vmatprep.subr.mxu0 0.0
        %1590 = vmatpush1.xpose.msra.mxu0 %v1552
        %1591 = vmatprep.subr.mxu0 0.0
        %1592 = vmatpush2.xpose.msra.mxu0 0.0
        %1593 = vmatprep.subr.mxu0 0.0
        %1594 = vmatpush2.xpose.msra.mxu0 0.0
        %1595 = vmatprep.subr.mxu0 0.0
        %1596 = vmatpush2.xpose.msra.mxu0 0.0
        %1597 = vmatprep.subr.mxu0 0.0
        %1598 = vmatpush2.xpose.msra.mxu0 0.0
        %1599 = vmatprep.subr.mxu0 0.0
        %1600 = vmatpush2.xpose.msra.mxu0 0.0
        %1601 = vmatprep.subr.mxu0 0.0
        %1602 = vmatpush2.xpose.msra.mxu0 0.0
        %1603 = vmatprep.subr.mxu0 0.0
        %1604 = vmatpush2.xpose.msra.mxu0 0.0
        %1605 = vmatprep.subr.mxu0 0.0
        %1606 = vmatpush2.xpose.msra.mxu0 0.0
        %1607 = vmatprep.subr.mxu0 0.0
        %1608 = vmatpush2.xpose.msra.mxu0 0.0
        %1609 = vmatprep.subr.mxu0 0.0
        %1610 = vmatpush2.xpose.msra.mxu0 0.0
        %1611 = vmatprep.subr.mxu0 0.0
        %1612 = vmatpush2.xpose.msra.mxu0 0.0
        %1613 = vmatprep.subr.mxu0 0.0
        %1614 = vmatpush2.xpose.msra.mxu0 0.0
        %1615 = vmatprep.subr.mxu0 0.0
        %1616 = vmatpush2.xpose.msra.mxu0 0.0
        %1617 = vmatprep.subr.mxu0 0.0
        %1618 = vmatpush2.xpose.msra.mxu0 0.0
        %1619 = vmatprep.subr.mxu0 0.0
        %1620 = vmatpush2.xpose.msra.mxu0 0.0
        %1621 = vmatprep.subr.mxu0 0.0
        %1622 = vmatpush2.xpose.msra.mxu0 0.0
        %1623 = vmatprep.mubr.f32.mxu0 0.0
        %1624 = vmatmul.mubr.f32.gmra.mxu0 %v1431
        %v1625 = vpop.f32.mrf.mxu0
        %v1626 = vadd.f32 0.0, %v1625
        %v1627 = vpop.f32.mrf.mxu0
        %1628 = vdwg.mxu0
        %v1629 = vrcp.pop %v1556
        %v1630 = vmul.f32 1.0, %v1629
        %v1631 = vrcp.pop %v1558
        %v1632 = vmul.f32 1.0, %v1631
        %1633 = vxpose.xlu0.b32.start [1/16] %v1630, 128
        %1634 = vxpose.xlu0.b32.cont [2/16] %v1632, 128
        %1635 = vxpose.xlu0.b32.cont [3/16] 0.0, 128
        %1636 = vxpose.xlu0.b32.cont [4/16] 0.0, 128
        %1637 = vxpose.xlu0.b32.cont [5/16] 0.0, 128
        %1638 = vxpose.xlu0.b32.cont [6/16] 0.0, 128
        %1639 = vxpose.xlu0.b32.cont [7/16] 0.0, 128
        %1640 = vxpose.xlu0.b32.cont [8/16] 0.0, 128
        %1641 = vxpose.xlu0.b32.cont [9/16] 0.0, 128
        %1642 = vxpose.xlu0.b32.cont [10/16] 0.0, 128
        %1643 = vxpose.xlu0.b32.cont [11/16] 0.0, 128
        %1644 = vxpose.xlu0.b32.cont [12/16] 0.0, 128
        %1645 = vxpose.xlu0.b32.cont [13/16] 0.0, 128
        %1646 = vxpose.xlu0.b32.cont [14/16] 0.0, 128
        %1647 = vxpose.xlu0.b32.cont [15/16] 0.0, 128
        %1648 = vxpose.xlu0.b32.end [16/16] 0.0, 128
        %v1649 = vpop.trf.xlu0
        %v1650 = vpop.trf.xlu0
        %v1651 = vpop.trf.xlu0
        %v1652 = vpop.trf.xlu0
        %v1653 = vpop.trf.xlu0
        %v1654 = vpop.trf.xlu0
        %v1655 = vpop.trf.xlu0
        %v1656 = vpop.trf.xlu0
        %v1657 = vpop.trf.xlu0
        %v1658 = vpop.trf.xlu0
        %v1659 = vpop.trf.xlu0
        %v1660 = vpop.trf.xlu0
        %v1661 = vpop.trf.xlu0
        %v1662 = vpop.trf.xlu0
        %v1663 = vpop.trf.xlu0
        %v1664 = vpop.trf.xlu0
        %v1665 = vlaneseq
        %v1666 = vshrl.u32 %v1665, 7
        %v1667 = vsub.s32 0, %v1666
        %v1668 = vrot.slane %v1649, %v1667
        %v1669 = vmul.f32 %v1626, %v1668
        %1670 = vst.msk [vmem:[#allocation4 + $0x18] sm:$0xff] %vm946, %v1669
        %v1671 = vld [vmem:[#allocation9] sm:$0xff]
        %v1672 = vld [vmem:[#allocation9 + $0x8] sm:$0xff]
        %v1673 = vld [vmem:[#allocation9 + $0x10] sm:$0xff]
        %v1674 = vld [vmem:[#allocation9 + $0x18] sm:$0xff]
        %v1675 = vld [vmem:[#allocation4] sm:$0xff]
        %v1676 = vld [vmem:[#allocation4 + $0x8] sm:$0xff]
        %v1677 = vld [vmem:[#allocation4 + $0x10] sm:$0xff]
        %v1678 = vld [vmem:[#allocation4 + $0x18] sm:$0xff]
        %v1679 = vld [vmem:[%s6] sm:$0xff]
        %v1680 = vld [vmem:[%s6 + $0x8] sm:$0xff]
        %v1681 = vld [vmem:[%s6 + $0x10] sm:$0xff]
        %v1682 = vld [vmem:[%s6 + $0x18] sm:$0xff]
        %1684 = vset.pattern.permute.xlu0 0
        %1685 = vperm.xlu0 %1684, %v1679
        %v1686 = vpop.permute.xlu0 %1685
        %1689 = vset.pattern.permute.xlu0 0
        %1690 = vperm.xlu0 %1689, %v1680
        %v1691 = vpop.permute.xlu0 %1690
        %1694 = vset.pattern.permute.xlu0 0
        %1695 = vperm.xlu0 %1694, %v1681
        %v1696 = vpop.permute.xlu0 %1695
        %1699 = vset.pattern.permute.xlu0 0
        %1700 = vperm.xlu0 %1699, %v1682
        %v1701 = vpop.permute.xlu0 %1700
        %v1704 = vsel %vm603, %v1671, 0
        %v1707 = vsel %vm603, %v1672, 0
        %v1710 = vsel %vm603, %v1673, 0
        %v1713 = vsel %vm603, %v1674, 0
        %1715 = vmatprep.subr.mxu0 0.0
        %1716 = vmatpush1.msra.mxu0 0.0
        %1717 = vmatprep.subr.mxu0 0.0
        %1718 = vmatpush1.msra.mxu0 0.0
        %1719 = vmatprep.subr.mxu0 0.0
        %1720 = vmatpush1.msra.mxu0 0.0
        %1721 = vmatprep.subr.mxu0 0.0
        %1722 = vmatpush1.msra.mxu0 0.0
        %1723 = vmatprep.subr.mxu0 0.0
        %1724 = vmatpush1.msra.mxu0 0.0
        %1725 = vmatprep.subr.mxu0 0.0
        %1726 = vmatpush1.msra.mxu0 0.0
        %1727 = vmatprep.subr.mxu0 0.0
        %1728 = vmatpush1.msra.mxu0 0.0
        %1729 = vmatprep.subr.mxu0 0.0
        %1730 = vmatpush1.msra.mxu0 0.0
        %1731 = vmatprep.subr.mxu0 0.0
        %1732 = vmatpush1.msra.mxu0 0.0
        %1733 = vmatprep.subr.mxu0 0.0
        %1734 = vmatpush1.msra.mxu0 0.0
        %1735 = vmatprep.subr.mxu0 0.0
        %1736 = vmatpush1.msra.mxu0 0.0
        %1737 = vmatprep.subr.mxu0 0.0
        %1738 = vmatpush1.msra.mxu0 0.0
        %1739 = vmatprep.subr.mxu0 0.0
        %1740 = vmatpush1.msra.mxu0 %v1678
        %1741 = vmatprep.subr.mxu0 0.0
        %1742 = vmatpush1.msra.mxu0 %v1677
        %1743 = vmatprep.subr.mxu0 0.0
        %1744 = vmatpush1.msra.mxu0 %v1676
        %1745 = vmatprep.subr.mxu0 0.0
        %1746 = vmatpush1.msra.mxu0 %v1675
        %1747 = vmatprep.subr.mxu0 0.0
        %1748 = vmatpush2.msra.mxu0 0.0
        %1749 = vmatprep.subr.mxu0 0.0
        %1750 = vmatpush2.msra.mxu0 0.0
        %1751 = vmatprep.subr.mxu0 0.0
        %1752 = vmatpush2.msra.mxu0 0.0
        %1753 = vmatprep.subr.mxu0 0.0
        %1754 = vmatpush2.msra.mxu0 0.0
        %1755 = vmatprep.subr.mxu0 0.0
        %1756 = vmatpush2.msra.mxu0 0.0
        %1757 = vmatprep.subr.mxu0 0.0
        %1758 = vmatpush2.msra.mxu0 0.0
        %1759 = vmatprep.subr.mxu0 0.0
        %1760 = vmatpush2.msra.mxu0 0.0
        %1761 = vmatprep.subr.mxu0 0.0
        %1762 = vmatpush2.msra.mxu0 0.0
        %1763 = vmatprep.subr.mxu0 0.0
        %1764 = vmatpush2.msra.mxu0 0.0
        %1765 = vmatprep.subr.mxu0 0.0
        %1766 = vmatpush2.msra.mxu0 0.0
        %1767 = vmatprep.subr.mxu0 0.0
        %1768 = vmatpush2.msra.mxu0 0.0
        %1769 = vmatprep.subr.mxu0 0.0
        %1770 = vmatpush2.msra.mxu0 0.0
        %1771 = vmatprep.subr.mxu0 0.0
        %1772 = vmatpush2.msra.mxu0 0.0
        %1773 = vmatprep.subr.mxu0 0.0
        %1774 = vmatpush2.msra.mxu0 0.0
        %1775 = vmatprep.subr.mxu0 0.0
        %1776 = vmatpush2.msra.mxu0 0.0
        %1777 = vmatprep.subr.mxu0 0.0
        %1778 = vmatpush2.msra.mxu0 0.0
        %1779 = vmatprep.mubr.f32.mxu0 0.0
        %1780 = vmatmul.mubr.f32.gmra.mxu0 %v1704
        %v1781 = vpop.f32.mrf.mxu0
        %v1782 = vadd.f32 %v1686, %v1781
        %v1783 = vpop.f32.mrf.mxu0
        %1784 = vmatprep.mubr.f32.mxu0 0.0
        %1785 = vmatmul.mubr.f32.gmra.mxu0 %v1707
        %v1786 = vpop.f32.mrf.mxu0
        %v1787 = vadd.f32 %v1691, %v1786
        %v1788 = vpop.f32.mrf.mxu0
        %1789 = vmatprep.mubr.f32.mxu0 0.0
        %1790 = vmatmul.mubr.f32.gmra.mxu0 %v1710
        %v1791 = vpop.f32.mrf.mxu0
        %v1792 = vadd.f32 %v1696, %v1791
        %v1793 = vpop.f32.mrf.mxu0
        %1794 = vmatprep.mubr.f32.mxu0 0.0
        %1795 = vmatmul.mubr.f32.gmra.mxu0 %v1713
        %v1796 = vpop.f32.mrf.mxu0
        %v1797 = vadd.f32 %v1701, %v1796
        %v1798 = vpop.f32.mrf.mxu0
        %1799 = vdwg.mxu0
        %1800 = vst.msk [vmem:[%s373] sm:$0xff] %vm946, %v1782
        %1801 = vst.msk [vmem:[%s373 + $0x8] sm:$0xff] %vm946, %v1787
        %1802 = vst.msk [vmem:[%s373 + $0x10] sm:$0xff] %vm946, %v1792
        %1803 = vst.msk [vmem:[%s373 + $0x18] sm:$0xff] %vm946, %v1797
        %p1804 = scmp.lt.s32.totalorder %s24, 1
        %s1805 = scalar_select %p1804, %s24, 1
        %p1806 = scmp.lt.s32.totalorder %s25, 0
        %s1807 = scalar_select %p1806, %s25, 0
        %s1808 = smul.addr %s1805, 4
        %s1809 = sadd.s32 %s1807, %s1808
        %s1810 = smul.addr %s1809, 8
        %s1811 = scalar_lea.vmem %s7, %s1810
        // Predicated region
        $region65: #{tpu_custom_call.1} parent=47 // pred_check
          %p1812 = pneg %p211
        $region66: #{tpu_custom_call.1} parent=47 // pred_check_branch
          %1814 = sbr.rel (%p1812) target = $region68
        $region67: #{tpu_custom_call.1} parent=47 // pred_region
          _
        $region68: #{tpu_custom_call.1} parent=47 // pred_fallthru
          _
      $region48: #{tpu_custom_call.1} parent=5 // pred_fallthru
        _
      %p1815 = scmp.le.s32.totalorder 2, %s15
      // Predicated region
      $region69: #{tpu_custom_call.1} parent=5 // pred_check
        %p1816 = pneg %p1815
      $region70: #{tpu_custom_call.1} parent=5 // pred_check_branch
        %1818 = sbr.rel (%p1816) target = $region72
      $region71: #{tpu_custom_call.1} parent=5 // pred_region
        %s1819 = ssub.s32 %s15, 2
        // Predicated region
        $region73: #{tpu_custom_call.1} parent=71 // pred_check
          %p1820 = pneg %p217
        $region74: #{tpu_custom_call.1} parent=71 // pred_check_branch
          %1822 = sbr.rel (%p1820) target = $region76
        $region75: #{tpu_custom_call.1} parent=71 // pred_region
          %p1823 = scmp.lt.s32.totalorder %s26, 1
          %s1824 = scalar_select %p1823, %s26, 1
          %p1825 = scmp.lt.s32.totalorder %s27, 0
          %s1826 = scalar_select %p1825, %s27, 0
          %s1827 = smul.addr %s1824, 4
          %s1828 = sadd.s32 %s1826, %s1827
          %s1829 = smul.addr %s1828, 8
          %s1830 = scalar_lea.vmem %s7, %s1829
        $region76: #{tpu_custom_call.1} parent=71 // pred_fallthru
          _
      $region72: #{tpu_custom_call.1} parent=5 // pred_fallthru
        _
    $region6: #{tpu_custom_call.1} parent=1 // loop_footer
      %s19 = sadd.s32 1, %s15
    $region7: #{tpu_custom_call.1} parent=1 // loop_footer_branch
      %14 = sbr.rel target = $region3
    $region8: #{tpu_custom_call.1} parent=1 // loop_exit
      _
    %1831 = vsyncpa [#allocation6], 1
    %s1832 = scalar_lea.sflag [#allocation6], 1
    %1833 = vsyncpa %s1832, 1
    %1834 = vsyncpa [#allocation8], 1

</llo_original>
